<compile_context>
chip_gen: v6e
topology: v6e:2x2x1
jax: 0.10.0
libtpu: 0.0.40
codegen_flags: <defaults>
</compile_context>

<pallas_src>
import functools
import math

import jax
import jax.numpy as jnp
from jax.experimental import pallas as pl
from jax.experimental.pallas import tpu as pltpu


def _layer_norm(v, g, b, eps=1e-5):
    mu = jnp.mean(v, axis=-1, keepdims=True)
    var = jnp.mean((v - mu) ** 2, axis=-1, keepdims=True)
    return (v - mu) * jax.lax.rsqrt(var + eps) * g + b


# Row layout of the packed per-layer vector slab (L, 8, 4E).
_ROW_LN1_G, _ROW_LN1_B, _ROW_LN2_G, _ROW_LN2_B = 0, 1, 2, 3
_ROW_BQKV, _ROW_BO, _ROW_FC2_B, _ROW_FC1_B = 4, 5, 6, 7


def _net_kernel(n_heads, matmul_dtype,
                x_ref, bias_ref,
                wqkv_ref, wo_ref, fc1_w_ref, fc2_w_ref, vec_ref,
                hln_g_ref, hln_b_ref, hw_ref, hb_ref,
                out_ref,
                h_ref, attn_ref):
    l = pl.program_id(1)
    n_layers = pl.num_programs(1)
    Bs, T, E = x_ref.shape
    H = n_heads
    Dh = E // H
    M = Bs * T

    # ---- once per batch shard: load the residual stream into VMEM scratch.
    @pl.when(l == 0)
    def _init():
        h_ref[...] = x_ref[...].reshape(M, E)

    def mm(a, w):   # MXU matmul: low-precision operands, f32 accumulation
        return jnp.dot(a.astype(matmul_dtype), w,
                       preferred_element_type=jnp.float32)

    # Packed per-layer vectors: one (8, 4E) load, static slices.
    vecs = vec_ref[0]                                       # (8, 4E) f32
    ln1_g = vecs[_ROW_LN1_G:_ROW_LN1_G + 1, :E]
    ln1_b = vecs[_ROW_LN1_B:_ROW_LN1_B + 1, :E]
    ln2_g = vecs[_ROW_LN2_G:_ROW_LN2_G + 1, :E]
    ln2_b = vecs[_ROW_LN2_B:_ROW_LN2_B + 1, :E]
    bqkv = vecs[_ROW_BQKV:_ROW_BQKV + 1, :3 * E]
    bo = vecs[_ROW_BO:_ROW_BO + 1, :E]
    fc2_b = vecs[_ROW_FC2_B:_ROW_FC2_B + 1, :E]
    fc1_b = vecs[_ROW_FC1_B:_ROW_FC1_B + 1, :]              # full (1, 4E)

    h = h_ref[...]                                          # (M, E) f32

    # ----------------- self-attention block (normalize_before=True) ----------
    y = _layer_norm(h, ln1_g, ln1_b)
    qkv = mm(y, wqkv_ref[0]) + bqkv          # (M, 3E); 1/sqrt(Dh) folded in wq/bq
    qkv3 = qkv.reshape(Bs, T, 3 * E)
    bias = bias_ref[...]                     # (Bs, 1, T) additive key-pad bias

    for hd in range(H):                      # loop over heads only (static)
        q_h = qkv3[:, :, hd * Dh:(hd + 1) * Dh].astype(matmul_dtype)
        k_h = qkv3[:, :, E + hd * Dh:E + (hd + 1) * Dh].astype(matmul_dtype)
        v_h = qkv3[:, :, 2 * E + hd * Dh:2 * E + (hd + 1) * Dh].astype(matmul_dtype)
        s = jnp.einsum('bqd,bkd->bqk', q_h, k_h,
                       preferred_element_type=jnp.float32) + bias   # (Bs,T,T)
        m = jnp.max(s, axis=-1, keepdims=True)
        p = jnp.exp(s - m)
        denom = jnp.sum(p, axis=-1, keepdims=True)
        p = p * pl.reciprocal(denom, approx=True)
        ctx = jnp.einsum('bqk,bkd->bqd', p.astype(matmul_dtype), v_h,
                         preferred_element_type=jnp.float32)        # (Bs,T,Dh)
        attn_ref[:, hd * Dh:(hd + 1) * Dh] = ctx.reshape(M, Dh)

    attn = mm(attn_ref[...], wo_ref[0]) + bo
    h = h + attn                       # dropout = identity at inference

    # ----------------- feed-forward block (normalize_before=True) ------------
    y = _layer_norm(h, ln2_g, ln2_b)
    y = mm(y, fc1_w_ref[0]) + fc1_b
    y = jnp.maximum(y, 0.0)            # relu (fairseq default activation_fn)
    y = mm(y, fc2_w_ref[0]) + fc2_b
    h = h + y
    h_ref[...] = h

    # ----------------- epilogue: max over seq + LayerNorm + Linear head ------
    @pl.when(l == n_layers - 1)
    def _finish():
        pooled = jnp.max(h.reshape(Bs, T, E), axis=1)                # (Bs, E)
        pooled = _layer_norm(pooled, hln_g_ref[...], hln_b_ref[...])
        res = mm(pooled, hw_ref[...]) + hb_ref[...]                  # (Bs, n_t)
        out_ref[0] = res.astype(out_ref.dtype)


def init_params(key, embdim, n_targets, n_layers):
    """Deterministic synthetic parameters (shapes match the PyTorch module).
    Linear weights are stored pre-transposed, i.e. (in_features, out_features)."""
    E, F, L = embdim, 4 * embdim, n_layers
    keys = jax.random.split(key, 14)

    def uni(k, shape, fan_in):
        bound = 1.0 / math.sqrt(fan_in)
        return jax.random.uniform(k, shape, jnp.float32, minval=-bound, maxval=bound)

    return dict(
        wq=uni(keys[0], (L, E, E), E),  bq=uni(keys[1], (L, E), E),
        wk=uni(keys[2], (L, E, E), E),  bk=uni(keys[3], (L, E), E),
        wv=uni(keys[4], (L, E, E), E),  bv=uni(keys[5], (L, E), E),
        wo=uni(keys[6], (L, E, E), E),  bo=uni(keys[7], (L, E), E),
        ln1_g=jnp.ones((L, E), jnp.float32),  ln1_b=jnp.zeros((L, E), jnp.float32),
        ln2_g=jnp.ones((L, E), jnp.float32),  ln2_b=jnp.zeros((L, E), jnp.float32),
        fc1_w=uni(keys[8], (L, E, F), E),  fc1_b=uni(keys[9], (L, F), E),
        fc2_w=uni(keys[10], (L, F, E), F), fc2_b=uni(keys[11], (L, E), F),
        head_ln_g=jnp.ones((1, E), jnp.float32),
        head_ln_b=jnp.zeros((1, E), jnp.float32),
        head_w=uni(keys[12], (E, n_targets), E),
        head_b=uni(keys[13], (1, n_targets), E),
    )


def net_forward(x, d, params, *, n_layers, n_heads,
                batch_block=None, matmul_dtype=jnp.bfloat16,
                vmem_limit_bytes=None):
    """Forward pass of `Net`.  `d` is unused by the reference forward().

    batch_block: rows of the batch processed per grid step.  Default = B
    (whole batch: max MXU occupancy, weights streamed once).  On v7x use
    batch_block = B // 2 so the parallel batch axis engages both TensorCores.
    """
    del d
    B, T, E = x.shape
    L, H = n_layers, n_heads
    Dh = E // H
    F = 4 * E
    n_targets = params['head_w'].shape[-1]
    Bs = B if batch_block is None else batch_block
    assert B % Bs == 0 and E % H == 0
    shards = B // Bs

    wdt = matmul_dtype
    scale = Dh ** -0.5

    # ---- parameter prep (done per call for simplicity; cache in real use) ---
    # Fused QKV weight (q-scale folded in), bf16 matmul weights, and the packed
    # (L, 8, 4E) per-layer vector slab.
    wqkv = jnp.concatenate(
        [params['wq'] * scale, params['wk'], params['wv']], axis=-1).astype(wdt)
    wo = params['wo'].astype(wdt)
    fc1_w = params['fc1_w'].astype(wdt)
    fc2_w = params['fc2_w'].astype(wdt)
    head_w = params['head_w'].astype(wdt)

    bqkv = jnp.concatenate(
        [params['bq'] * scale, params['bk'], params['bv']], axis=-1)   # (L, 3E)

    def row(v):   # (L, W<=F) -> (L, 1, F) f32, zero-padded on lanes
        return jnp.pad(v.astype(jnp.float32),
                       ((0, 0), (0, F - v.shape[-1])))[:, None, :]

    vecs = jnp.concatenate([
        row(params['ln1_g']), row(params['ln1_b']),
        row(params['ln2_g']), row(params['ln2_b']),
        row(bqkv), row(params['bo']),
        row(params['fc2_b']), row(params['fc1_b'])], axis=1)           # (L, 8, F)

    # Key-padding additive bias, built once in the (B, 1, T) key-on-lanes
    # layout the scores need (avoids an in-kernel minor-dim relayout).
    key_bias = jnp.where(x[:, :, 0] == 0.0, -1e30, 0.0) \
                  .astype(jnp.float32)[:, None, :]                     # (B, 1, T)

    args = (x, key_bias, wqkv, wo, fc1_w, fc2_w, vecs,
            params['head_ln_g'], params['head_ln_b'], head_w, params['head_b'])

    def per_layer(shape):            # streamed per layer-grid step
        return pl.BlockSpec((1,) + shape, lambda b, l: (l, 0, 0))

    def shared(shape):               # layer-invariant (head) params
        nd = len(shape)
        return pl.BlockSpec(shape, lambda b, l, _nd=nd: (0,) * _nd)

    in_specs = [
        pl.BlockSpec((Bs, T, E), lambda b, l: (b, 0, 0)),    # x
        pl.BlockSpec((Bs, 1, T), lambda b, l: (b, 0, 0)),    # key-pad bias
        per_layer((E, 3 * E)),                               # fused Wqkv
        per_layer((E, E)),                                   # Wo
        per_layer((E, F)),                                   # fc1 W
        per_layer((F, E)),                                   # fc2 W
        per_layer((8, F)),                                   # packed vectors
        shared((1, E)), shared((1, E)),                      # head LN gamma/beta
        shared((E, n_targets)), shared((1, n_targets)),      # head W/b
    ]
    # Output block (1, Bs, n_targets): last two dims always equal full array
    # dims, so arbitrary Bs stays tiling-legal; written once at the last layer.
    out_specs = pl.BlockSpec((1, Bs, n_targets), lambda b, l: (b, 0, 0))

    if vmem_limit_bytes is None:
        try:
            cap = pltpu.get_tpu_info().vmem_capacity_bytes
        except Exception:  # pragma: no cover - conservative fallback
            cap = 128 * 1024 * 1024
        vmem_limit_bytes = min(int(0.85 * cap), 112 * 1024 * 1024)

    itm = jnp.dtype(wdt).itemsize
    flops = int(L * (8 * B * T * E * E + 4 * B * T * E * F + 4 * B * T * T * E)
                + 2 * B * E * n_targets)
    transcendentals = int(L * B * H * T * T + 2 * L * B * T + B)
    bytes_accessed = int(shards * L * ((4 * E * E + 2 * E * F) * itm + 8 * F * 4)
                         + (B * T * E + B * T + B * n_targets) * 4
                         + (E * n_targets) * itm)

    kernel = functools.partial(_net_kernel, H, wdt)
    out = pl.pallas_call(
        kernel,
        out_shape=jax.ShapeDtypeStruct((shards, Bs, n_targets), jnp.float32),
        grid=(shards, L),
        in_specs=in_specs,
        out_specs=out_specs,
        scratch_shapes=[pltpu.VMEM((Bs * T, E), jnp.float32),   # residual stream
                        pltpu.VMEM((Bs * T, E), jnp.float32)],  # attn context slab
        compiler_params=pltpu.CompilerParams(
            dimension_semantics=("parallel", "arbitrary"),
            vmem_limit_bytes=vmem_limit_bytes),
        cost_estimate=pl.CostEstimate(flops=flops,
                                      transcendentals=transcendentals,
                                      bytes_accessed=bytes_accessed),
    )(*args)
    return out.reshape(B, n_targets)


if __name__ == "__main__":
    embdim, n_targets, n_descr, n_layers, n_heads = 32, 4, 8, 2, 4
    B, T = 2, 8

    key = jax.random.PRNGKey(0)
    kx, kd, kp = jax.random.split(key, 3)
    x = jax.random.normal(kx, (B, T, embdim), jnp.float32)
    # force one padded position (feature-0 == 0) so the mask path is exercised
    x = x.at[0, T - 1, 0].set(0.0)
    d = jax.random.normal(kd, (B, n_descr), jnp.float32)   # unused by forward

    params = init_params(kp, embdim, n_targets, n_layers)
    out = net_forward(x, d, params, n_layers=n_layers, n_heads=n_heads)
    jax.block_until_ready(out)
    assert out.shape == (B, n_targets) and out.dtype == jnp.float32
    assert bool(jnp.all(jnp.isfinite(out)))
    print("KERNEL_OK")
</pallas_src>

<mosaic_0001>
module attributes {stable_mosaic.version = 11 : i64} {
  func.func @_net_kernel(%arg0: i32, %arg1: i32, %arg2: memref<2x8x32xf32, #tpu.memory_space<vmem>>, %arg3: memref<2x1x8xf32, #tpu.memory_space<vmem>>, %arg4: memref<1x32x96xbf16, #tpu.memory_space<vmem>>, %arg5: memref<1x32x32xbf16, #tpu.memory_space<vmem>>, %arg6: memref<1x32x128xbf16, #tpu.memory_space<vmem>>, %arg7: memref<1x128x32xbf16, #tpu.memory_space<vmem>>, %arg8: memref<1x8x128xf32, #tpu.memory_space<vmem>>, %arg9: memref<1x32xf32, #tpu.memory_space<vmem>>, %arg10: memref<1x32xf32, #tpu.memory_space<vmem>>, %arg11: memref<32x4xbf16, #tpu.memory_space<vmem>>, %arg12: memref<1x4xf32, #tpu.memory_space<vmem>>, %arg13: memref<1x2x4xf32, #tpu.memory_space<vmem>>, %arg14: memref<16x32xf32, #tpu.memory_space<vmem>>, %arg15: memref<16x32xf32, #tpu.memory_space<vmem>>) attributes {dimension_semantics = [#tpu.dimension_semantics<parallel>, #tpu.dimension_semantics<arbitrary>], iteration_bounds = array<i64: 1, 2>, scalar_prefetch = 0 : i64, scratch_operands = 2 : i64, tpu.core_type = #tpu.core_type<tc>, window_params = [{transform_indices = @transform_0, window_bounds = array<i64: 2, 8, 32>}, {transform_indices = @transform_1, window_bounds = array<i64: 2, 1, 8>}, {transform_indices = @transform_2, window_bounds = array<i64: 1, 32, 96>}, {transform_indices = @transform_3, window_bounds = array<i64: 1, 32, 32>}, {transform_indices = @transform_4, window_bounds = array<i64: 1, 32, 128>}, {transform_indices = @transform_5, window_bounds = array<i64: 1, 128, 32>}, {transform_indices = @transform_6, window_bounds = array<i64: 1, 8, 128>}, {pipeline_mode = #tpu.pipeline_mode<synchronous>, transform_indices = @transform_7, window_bounds = array<i64: 1, 32>}, {pipeline_mode = #tpu.pipeline_mode<synchronous>, transform_indices = @transform_8, window_bounds = array<i64: 1, 32>}, {pipeline_mode = #tpu.pipeline_mode<synchronous>, transform_indices = @transform_9, window_bounds = array<i64: 32, 4>}, {pipeline_mode = #tpu.pipeline_mode<synchronous>, transform_indices = @transform_10, window_bounds = array<i64: 1, 4>}, {transform_indices = @transform_11, window_bounds = array<i64: 1, 2, 4>}]} {
    %c0_i32 = arith.constant 0 : i32
    %0 = arith.cmpi eq, %arg1, %c0_i32 : i32
    %1 = arith.extui %0 : i1 to i32
    %c0_i32_0 = arith.constant 0 : i32
    %2 = arith.cmpi ne, %1, %c0_i32_0 : i32
    scf.if %2 {
      %c0_60 = arith.constant 0 : index
      %c0_61 = arith.constant 0 : index
      %c0_62 = arith.constant 0 : index
      %185 = vector.load %arg2[%c0_60, %c0_61, %c0_62] : memref<2x8x32xf32, #tpu.memory_space<vmem>>, vector<2x8x32xf32>
      %186 = vector.shape_cast %185 : vector<2x8x32xf32> to vector<16x32xf32>
      %c0_63 = arith.constant 0 : index
      %c0_64 = arith.constant 0 : index
      %187 = vector.load %arg14[%c0_63, %c0_64] : memref<16x32xf32, #tpu.memory_space<vmem>>, vector<16x32xf32>
      tpu.vector_store %arg14[%c0_63, %c0_64], %186 {strides = array<i32>} : memref<16x32xf32, #tpu.memory_space<vmem>>, vector<16x32xf32>,
    } else {
    }
    %c0 = arith.constant 0 : index
    %c0_1 = arith.constant 0 : index
    %c0_2 = arith.constant 0 : index
    %3 = vector.load %arg8[%c0, %c0_1, %c0_2] : memref<1x8x128xf32, #tpu.memory_space<vmem>>, vector<1x8x128xf32>
    %4 = vector.shape_cast %3 : vector<1x8x128xf32> to vector<8x128xf32>
    %5 = vector.extract_strided_slice %4 {offsets = [0, 0], sizes = [1, 32], strides = [1, 1]} : vector<8x128xf32> to vector<1x32xf32>
    %6 = vector.extract_strided_slice %4 {offsets = [1, 0], sizes = [1, 32], strides = [1, 1]} : vector<8x128xf32> to vector<1x32xf32>
    %7 = vector.extract_strided_slice %4 {offsets = [2, 0], sizes = [1, 32], strides = [1, 1]} : vector<8x128xf32> to vector<1x32xf32>
    %8 = vector.extract_strided_slice %4 {offsets = [3, 0], sizes = [1, 32], strides = [1, 1]} : vector<8x128xf32> to vector<1x32xf32>
    %9 = vector.extract_strided_slice %4 {offsets = [4, 0], sizes = [1, 96], strides = [1, 1]} : vector<8x128xf32> to vector<1x96xf32>
    %10 = vector.extract_strided_slice %4 {offsets = [5, 0], sizes = [1, 32], strides = [1, 1]} : vector<8x128xf32> to vector<1x32xf32>
    %11 = vector.extract_strided_slice %4 {offsets = [6, 0], sizes = [1, 32], strides = [1, 1]} : vector<8x128xf32> to vector<1x32xf32>
    %12 = vector.extract_strided_slice %4 {offsets = [7, 0], sizes = [1, 128], strides = [1, 1]} : vector<8x128xf32> to vector<1x128xf32>
    %c0_3 = arith.constant 0 : index
    %c0_4 = arith.constant 0 : index
    %13 = vector.load %arg14[%c0_3, %c0_4] : memref<16x32xf32, #tpu.memory_space<vmem>>, vector<16x32xf32>
    %cst = arith.constant dense<0.000000e+00> : vector<16xf32>
    %14 = vector.multi_reduction <add>, %13, %cst [1] : vector<16x32xf32> to vector<16xf32>
    %15 = vector.shape_cast %14 : vector<16xf32> to vector<16x1xf32>
    %cst_5 = arith.constant 3.200000e+01 : f32
    %16 = vector.broadcast %cst_5 : f32 to vector<16x1xf32>
    %17 = arith.divf %15, %16 : vector<16x1xf32>
    %18 = vector.broadcast %17 : vector<16x1xf32> to vector<16x32xf32>
    %19 = arith.subf %13, %18 : vector<16x32xf32>
    %20 = arith.mulf %19, %19 : vector<16x32xf32>
    %cst_6 = arith.constant dense<0.000000e+00> : vector<16xf32>
    %21 = vector.multi_reduction <add>, %20, %cst_6 [1] : vector<16x32xf32> to vector<16xf32>
    %22 = vector.shape_cast %21 : vector<16xf32> to vector<16x1xf32>
    %cst_7 = arith.constant 3.200000e+01 : f32
    %23 = vector.broadcast %cst_7 : f32 to vector<16x1xf32>
    %24 = arith.divf %22, %23 : vector<16x1xf32>
    %25 = vector.broadcast %17 : vector<16x1xf32> to vector<16x32xf32>
    %26 = arith.subf %13, %25 : vector<16x32xf32>
    %cst_8 = arith.constant 9.99999974E-6 : f32
    %27 = vector.broadcast %cst_8 : f32 to vector<16x1xf32>
    %28 = arith.addf %24, %27 : vector<16x1xf32>
    %29 = math.rsqrt %28 : vector<16x1xf32>
    %30 = vector.broadcast %29 : vector<16x1xf32> to vector<16x32xf32>
    %31 = arith.mulf %26, %30 : vector<16x32xf32>
    %32 = vector.broadcast %5 : vector<1x32xf32> to vector<16x32xf32>
    %33 = arith.mulf %31, %32 : vector<16x32xf32>
    %34 = vector.broadcast %6 : vector<1x32xf32> to vector<16x32xf32>
    %35 = arith.addf %33, %34 : vector<16x32xf32>
    %c0_9 = arith.constant 0 : index
    %c0_10 = arith.constant 0 : index
    %c0_11 = arith.constant 0 : index
    %36 = vector.load %arg4[%c0_9, %c0_10, %c0_11] : memref<1x32x96xbf16, #tpu.memory_space<vmem>>, vector<1x32x96xbf16>
    %37 = vector.shape_cast %36 : vector<1x32x96xbf16> to vector<32x96xbf16>
    %38 = arith.truncf %35 : vector<16x32xf32> to vector<16x32xbf16>
    %cst_12 = arith.constant dense<0.000000e+00> : vector<16x96xf32>
    %39 = tpu.matmul %38, %37, %cst_12 {dimension_numbers = #tpu.dot_dimension_numbers<[1], [0], [0], [1], [0, 0, 1, 1], [], []>} : vector<16x32xbf16>, vector<32x96xbf16>, vector<16x96xf32> -> vector<16x96xf32>
    %40 = vector.broadcast %9 : vector<1x96xf32> to vector<16x96xf32>
    %41 = arith.addf %39, %40 : vector<16x96xf32>
    %42 = vector.shape_cast %41 : vector<16x96xf32> to vector<2x8x96xf32>
    %c0_13 = arith.constant 0 : index
    %c0_14 = arith.constant 0 : index
    %c0_15 = arith.constant 0 : index
    %43 = vector.load %arg3[%c0_13, %c0_14, %c0_15] : memref<2x1x8xf32, #tpu.memory_space<vmem>>, vector<2x1x8xf32>
    %44 = vector.extract_strided_slice %42 {offsets = [0, 0, 0], sizes = [2, 8, 8], strides = [1, 1, 1]} : vector<2x8x96xf32> to vector<2x8x8xf32>
    %45 = arith.truncf %44 : vector<2x8x8xf32> to vector<2x8x8xbf16>
    %46 = vector.extract_strided_slice %42 {offsets = [0, 0, 32], sizes = [2, 8, 8], strides = [1, 1, 1]} : vector<2x8x96xf32> to vector<2x8x8xf32>
    %47 = arith.truncf %46 : vector<2x8x8xf32> to vector<2x8x8xbf16>
    %48 = vector.extract_strided_slice %42 {offsets = [0, 0, 64], sizes = [2, 8, 8], strides = [1, 1, 1]} : vector<2x8x96xf32> to vector<2x8x8xf32>
    %49 = arith.truncf %48 : vector<2x8x8xf32> to vector<2x8x8xbf16>
    "tpu.trace_start"() <{level = 10 : i32, message = "bqd,bkd->bqk"}> : () -> ()
    %cst_16 = arith.constant dense<0.000000e+00> : vector<2x8x8xf32>
    %50 = tpu.matmul %45, %47, %cst_16 {dimension_numbers = #tpu.dot_dimension_numbers<[2], [2], [1], [1], [0, 0, 0, 1, 1, 1], [0], [0]>} : vector<2x8x8xbf16>, vector<2x8x8xbf16>, vector<2x8x8xf32> -> vector<2x8x8xf32>
    "tpu.trace_stop"() : () -> ()
    %51 = vector.broadcast %43 : vector<2x1x8xf32> to vector<2x8x8xf32>
    %52 = arith.addf %50, %51 : vector<2x8x8xf32>
    %cst_17 = arith.constant dense<0xFF800000> : vector<2x8xf32>
    %53 = vector.multi_reduction <maximumf>, %52, %cst_17 [2] : vector<2x8x8xf32> to vector<2x8xf32>
    %54 = vector.shape_cast %53 : vector<2x8xf32> to vector<2x8x1xf32>
    %55 = vector.broadcast %54 : vector<2x8x1xf32> to vector<2x8x8xf32>
    %56 = arith.subf %52, %55 : vector<2x8x8xf32>
    %57 = math.exp %56 : vector<2x8x8xf32>
    %cst_18 = arith.constant dense<0.000000e+00> : vector<2x8xf32>
    %58 = vector.multi_reduction <add>, %57, %cst_18 [2] : vector<2x8x8xf32> to vector<2x8xf32>
    %59 = vector.shape_cast %58 : vector<2x8xf32> to vector<2x8x1xf32>
    %60 = tpu.reciprocal %59 {approx = true} : vector<2x8x1xf32> -> vector<2x8x1xf32>
    %61 = vector.broadcast %60 : vector<2x8x1xf32> to vector<2x8x8xf32>
    %62 = arith.mulf %57, %61 : vector<2x8x8xf32>
    %63 = arith.truncf %62 : vector<2x8x8xf32> to vector<2x8x8xbf16>
    "tpu.trace_start"() <{level = 10 : i32, message = "bqk,bkd->bqd"}> : () -> ()
    %cst_19 = arith.constant dense<0.000000e+00> : vector<2x8x8xf32>
    %64 = tpu.matmul %63, %49, %cst_19 {dimension_numbers = #tpu.dot_dimension_numbers<[2], [1], [1], [2], [0, 0, 0, 1, 1, 2], [0], [0]>} : vector<2x8x8xbf16>, vector<2x8x8xbf16>, vector<2x8x8xf32> -> vector<2x8x8xf32>
    "tpu.trace_stop"() : () -> ()
    %65 = vector.shape_cast %64 : vector<2x8x8xf32> to vector<16x8xf32>
    %c0_20 = arith.constant 0 : index
    %c0_21 = arith.constant 0 : index
    %66 = vector.load %arg15[%c0_20, %c0_21] : memref<16x32xf32, #tpu.memory_space<vmem>>, vector<16x8xf32>
    tpu.vector_store %arg15[%c0_20, %c0_21], %65 {strides = array<i32>} : memref<16x32xf32, #tpu.memory_space<vmem>>, vector<16x8xf32>,
    %67 = vector.extract_strided_slice %42 {offsets = [0, 0, 8], sizes = [2, 8, 8], strides = [1, 1, 1]} : vector<2x8x96xf32> to vector<2x8x8xf32>
    %68 = arith.truncf %67 : vector<2x8x8xf32> to vector<2x8x8xbf16>
    %69 = vector.extract_strided_slice %42 {offsets = [0, 0, 40], sizes = [2, 8, 8], strides = [1, 1, 1]} : vector<2x8x96xf32> to vector<2x8x8xf32>
    %70 = arith.truncf %69 : vector<2x8x8xf32> to vector<2x8x8xbf16>
    %71 = vector.extract_strided_slice %42 {offsets = [0, 0, 72], sizes = [2, 8, 8], strides = [1, 1, 1]} : vector<2x8x96xf32> to vector<2x8x8xf32>
    %72 = arith.truncf %71 : vector<2x8x8xf32> to vector<2x8x8xbf16>
    "tpu.trace_start"() <{level = 10 : i32, message = "bqd,bkd->bqk"}> : () -> ()
    %cst_22 = arith.constant dense<0.000000e+00> : vector<2x8x8xf32>
    %73 = tpu.matmul %68, %70, %cst_22 {dimension_numbers = #tpu.dot_dimension_numbers<[2], [2], [1], [1], [0, 0, 0, 1, 1, 1], [0], [0]>} : vector<2x8x8xbf16>, vector<2x8x8xbf16>, vector<2x8x8xf32> -> vector<2x8x8xf32>
    "tpu.trace_stop"() : () -> ()
    %74 = vector.broadcast %43 : vector<2x1x8xf32> to vector<2x8x8xf32>
    %75 = arith.addf %73, %74 : vector<2x8x8xf32>
    %cst_23 = arith.constant dense<0xFF800000> : vector<2x8xf32>
    %76 = vector.multi_reduction <maximumf>, %75, %cst_23 [2] : vector<2x8x8xf32> to vector<2x8xf32>
    %77 = vector.shape_cast %76 : vector<2x8xf32> to vector<2x8x1xf32>
    %78 = vector.broadcast %77 : vector<2x8x1xf32> to vector<2x8x8xf32>
    %79 = arith.subf %75, %78 : vector<2x8x8xf32>
    %80 = math.exp %79 : vector<2x8x8xf32>
    %cst_24 = arith.constant dense<0.000000e+00> : vector<2x8xf32>
    %81 = vector.multi_reduction <add>, %80, %cst_24 [2] : vector<2x8x8xf32> to vector<2x8xf32>
    %82 = vector.shape_cast %81 : vector<2x8xf32> to vector<2x8x1xf32>
    %83 = tpu.reciprocal %82 {approx = true} : vector<2x8x1xf32> -> vector<2x8x1xf32>
    %84 = vector.broadcast %83 : vector<2x8x1xf32> to vector<2x8x8xf32>
    %85 = arith.mulf %80, %84 : vector<2x8x8xf32>
    %86 = arith.truncf %85 : vector<2x8x8xf32> to vector<2x8x8xbf16>
    "tpu.trace_start"() <{level = 10 : i32, message = "bqk,bkd->bqd"}> : () -> ()
    %cst_25 = arith.constant dense<0.000000e+00> : vector<2x8x8xf32>
    %87 = tpu.matmul %86, %72, %cst_25 {dimension_numbers = #tpu.dot_dimension_numbers<[2], [1], [1], [2], [0, 0, 0, 1, 1, 2], [0], [0]>} : vector<2x8x8xbf16>, vector<2x8x8xbf16>, vector<2x8x8xf32> -> vector<2x8x8xf32>
    "tpu.trace_stop"() : () -> ()
    %88 = vector.shape_cast %87 : vector<2x8x8xf32> to vector<16x8xf32>
    %c0_26 = arith.constant 0 : index
    %c8 = arith.constant 8 : index
    %89 = vector.load %arg15[%c0_26, %c8] : memref<16x32xf32, #tpu.memory_space<vmem>>, vector<16x8xf32>
    tpu.vector_store %arg15[%c0_26, %c8], %88 {strides = array<i32>} : memref<16x32xf32, #tpu.memory_space<vmem>>, vector<16x8xf32>,
    %90 = vector.extract_strided_slice %42 {offsets = [0, 0, 16], sizes = [2, 8, 8], strides = [1, 1, 1]} : vector<2x8x96xf32> to vector<2x8x8xf32>
    %91 = arith.truncf %90 : vector<2x8x8xf32> to vector<2x8x8xbf16>
    %92 = vector.extract_strided_slice %42 {offsets = [0, 0, 48], sizes = [2, 8, 8], strides = [1, 1, 1]} : vector<2x8x96xf32> to vector<2x8x8xf32>
    %93 = arith.truncf %92 : vector<2x8x8xf32> to vector<2x8x8xbf16>
    %94 = vector.extract_strided_slice %42 {offsets = [0, 0, 80], sizes = [2, 8, 8], strides = [1, 1, 1]} : vector<2x8x96xf32> to vector<2x8x8xf32>
    %95 = arith.truncf %94 : vector<2x8x8xf32> to vector<2x8x8xbf16>
    "tpu.trace_start"() <{level = 10 : i32, message = "bqd,bkd->bqk"}> : () -> ()
    %cst_27 = arith.constant dense<0.000000e+00> : vector<2x8x8xf32>
    %96 = tpu.matmul %91, %93, %cst_27 {dimension_numbers = #tpu.dot_dimension_numbers<[2], [2], [1], [1], [0, 0, 0, 1, 1, 1], [0], [0]>} : vector<2x8x8xbf16>, vector<2x8x8xbf16>, vector<2x8x8xf32> -> vector<2x8x8xf32>
    "tpu.trace_stop"() : () -> ()
    %97 = vector.broadcast %43 : vector<2x1x8xf32> to vector<2x8x8xf32>
    %98 = arith.addf %96, %97 : vector<2x8x8xf32>
    %cst_28 = arith.constant dense<0xFF800000> : vector<2x8xf32>
    %99 = vector.multi_reduction <maximumf>, %98, %cst_28 [2] : vector<2x8x8xf32> to vector<2x8xf32>
    %100 = vector.shape_cast %99 : vector<2x8xf32> to vector<2x8x1xf32>
    %101 = vector.broadcast %100 : vector<2x8x1xf32> to vector<2x8x8xf32>
    %102 = arith.subf %98, %101 : vector<2x8x8xf32>
    %103 = math.exp %102 : vector<2x8x8xf32>
    %cst_29 = arith.constant dense<0.000000e+00> : vector<2x8xf32>
    %104 = vector.multi_reduction <add>, %103, %cst_29 [2] : vector<2x8x8xf32> to vector<2x8xf32>
    %105 = vector.shape_cast %104 : vector<2x8xf32> to vector<2x8x1xf32>
    %106 = tpu.reciprocal %105 {approx = true} : vector<2x8x1xf32> -> vector<2x8x1xf32>
    %107 = vector.broadcast %106 : vector<2x8x1xf32> to vector<2x8x8xf32>
    %108 = arith.mulf %103, %107 : vector<2x8x8xf32>
    %109 = arith.truncf %108 : vector<2x8x8xf32> to vector<2x8x8xbf16>
    "tpu.trace_start"() <{level = 10 : i32, message = "bqk,bkd->bqd"}> : () -> ()
    %cst_30 = arith.constant dense<0.000000e+00> : vector<2x8x8xf32>
    %110 = tpu.matmul %109, %95, %cst_30 {dimension_numbers = #tpu.dot_dimension_numbers<[2], [1], [1], [2], [0, 0, 0, 1, 1, 2], [0], [0]>} : vector<2x8x8xbf16>, vector<2x8x8xbf16>, vector<2x8x8xf32> -> vector<2x8x8xf32>
    "tpu.trace_stop"() : () -> ()
    %111 = vector.shape_cast %110 : vector<2x8x8xf32> to vector<16x8xf32>
    %c0_31 = arith.constant 0 : index
    %c16 = arith.constant 16 : index
    %112 = vector.load %arg15[%c0_31, %c16] : memref<16x32xf32, #tpu.memory_space<vmem>>, vector<16x8xf32>
    tpu.vector_store %arg15[%c0_31, %c16], %111 {strides = array<i32>} : memref<16x32xf32, #tpu.memory_space<vmem>>, vector<16x8xf32>,
    %113 = vector.extract_strided_slice %42 {offsets = [0, 0, 24], sizes = [2, 8, 8], strides = [1, 1, 1]} : vector<2x8x96xf32> to vector<2x8x8xf32>
    %114 = arith.truncf %113 : vector<2x8x8xf32> to vector<2x8x8xbf16>
    %115 = vector.extract_strided_slice %42 {offsets = [0, 0, 56], sizes = [2, 8, 8], strides = [1, 1, 1]} : vector<2x8x96xf32> to vector<2x8x8xf32>
    %116 = arith.truncf %115 : vector<2x8x8xf32> to vector<2x8x8xbf16>
    %117 = vector.extract_strided_slice %42 {offsets = [0, 0, 88], sizes = [2, 8, 8], strides = [1, 1, 1]} : vector<2x8x96xf32> to vector<2x8x8xf32>
    %118 = arith.truncf %117 : vector<2x8x8xf32> to vector<2x8x8xbf16>
    "tpu.trace_start"() <{level = 10 : i32, message = "bqd,bkd->bqk"}> : () -> ()
    %cst_32 = arith.constant dense<0.000000e+00> : vector<2x8x8xf32>
    %119 = tpu.matmul %114, %116, %cst_32 {dimension_numbers = #tpu.dot_dimension_numbers<[2], [2], [1], [1], [0, 0, 0, 1, 1, 1], [0], [0]>} : vector<2x8x8xbf16>, vector<2x8x8xbf16>, vector<2x8x8xf32> -> vector<2x8x8xf32>
    "tpu.trace_stop"() : () -> ()
    %120 = vector.broadcast %43 : vector<2x1x8xf32> to vector<2x8x8xf32>
    %121 = arith.addf %119, %120 : vector<2x8x8xf32>
    %cst_33 = arith.constant dense<0xFF800000> : vector<2x8xf32>
    %122 = vector.multi_reduction <maximumf>, %121, %cst_33 [2] : vector<2x8x8xf32> to vector<2x8xf32>
    %123 = vector.shape_cast %122 : vector<2x8xf32> to vector<2x8x1xf32>
    %124 = vector.broadcast %123 : vector<2x8x1xf32> to vector<2x8x8xf32>
    %125 = arith.subf %121, %124 : vector<2x8x8xf32>
    %126 = math.exp %125 : vector<2x8x8xf32>
    %cst_34 = arith.constant dense<0.000000e+00> : vector<2x8xf32>
    %127 = vector.multi_reduction <add>, %126, %cst_34 [2] : vector<2x8x8xf32> to vector<2x8xf32>
    %128 = vector.shape_cast %127 : vector<2x8xf32> to vector<2x8x1xf32>
    %129 = tpu.reciprocal %128 {approx = true} : vector<2x8x1xf32> -> vector<2x8x1xf32>
    %130 = vector.broadcast %129 : vector<2x8x1xf32> to vector<2x8x8xf32>
    %131 = arith.mulf %126, %130 : vector<2x8x8xf32>
    %132 = arith.truncf %131 : vector<2x8x8xf32> to vector<2x8x8xbf16>
    "tpu.trace_start"() <{level = 10 : i32, message = "bqk,bkd->bqd"}> : () -> ()
    %cst_35 = arith.constant dense<0.000000e+00> : vector<2x8x8xf32>
    %133 = tpu.matmul %132, %118, %cst_35 {dimension_numbers = #tpu.dot_dimension_numbers<[2], [1], [1], [2], [0, 0, 0, 1, 1, 2], [0], [0]>} : vector<2x8x8xbf16>, vector<2x8x8xbf16>, vector<2x8x8xf32> -> vector<2x8x8xf32>
    "tpu.trace_stop"() : () -> ()
    %134 = vector.shape_cast %133 : vector<2x8x8xf32> to vector<16x8xf32>
    %c0_36 = arith.constant 0 : index
    %c24 = arith.constant 24 : index
    %135 = vector.load %arg15[%c0_36, %c24] : memref<16x32xf32, #tpu.memory_space<vmem>>, vector<16x8xf32>
    tpu.vector_store %arg15[%c0_36, %c24], %134 {strides = array<i32>} : memref<16x32xf32, #tpu.memory_space<vmem>>, vector<16x8xf32>,
    %c0_37 = arith.constant 0 : index
    %c0_38 = arith.constant 0 : index
    %136 = vector.load %arg15[%c0_37, %c0_38] : memref<16x32xf32, #tpu.memory_space<vmem>>, vector<16x32xf32>
    %c0_39 = arith.constant 0 : index
    %c0_40 = arith.constant 0 : index
    %c0_41 = arith.constant 0 : index
    %137 = vector.load %arg5[%c0_39, %c0_40, %c0_41] : memref<1x32x32xbf16, #tpu.memory_space<vmem>>, vector<1x32x32xbf16>
    %138 = vector.shape_cast %137 : vector<1x32x32xbf16> to vector<32x32xbf16>
    %139 = arith.truncf %136 : vector<16x32xf32> to vector<16x32xbf16>
    %cst_42 = arith.constant dense<0.000000e+00> : vector<16x32xf32>
    %140 = tpu.matmul %139, %138, %cst_42 {dimension_numbers = #tpu.dot_dimension_numbers<[1], [0], [0], [1], [0, 0, 1, 1], [], []>} : vector<16x32xbf16>, vector<32x32xbf16>, vector<16x32xf32> -> vector<16x32xf32>
    %141 = vector.broadcast %10 : vector<1x32xf32> to vector<16x32xf32>
    %142 = arith.addf %140, %141 : vector<16x32xf32>
    %143 = arith.addf %13, %142 : vector<16x32xf32>
    %cst_43 = arith.constant dense<0.000000e+00> : vector<16xf32>
    %144 = vector.multi_reduction <add>, %143, %cst_43 [1] : vector<16x32xf32> to vector<16xf32>
    %145 = vector.shape_cast %144 : vector<16xf32> to vector<16x1xf32>
    %cst_44 = arith.constant 3.200000e+01 : f32
    %146 = vector.broadcast %cst_44 : f32 to vector<16x1xf32>
    %147 = arith.divf %145, %146 : vector<16x1xf32>
    %148 = vector.broadcast %147 : vector<16x1xf32> to vector<16x32xf32>
    %149 = arith.subf %143, %148 : vector<16x32xf32>
    %150 = arith.mulf %149, %149 : vector<16x32xf32>
    %cst_45 = arith.constant dense<0.000000e+00> : vector<16xf32>
    %151 = vector.multi_reduction <add>, %150, %cst_45 [1] : vector<16x32xf32> to vector<16xf32>
    %152 = vector.shape_cast %151 : vector<16xf32> to vector<16x1xf32>
    %cst_46 = arith.constant 3.200000e+01 : f32
    %153 = vector.broadcast %cst_46 : f32 to vector<16x1xf32>
    %154 = arith.divf %152, %153 : vector<16x1xf32>
    %155 = vector.broadcast %147 : vector<16x1xf32> to vector<16x32xf32>
    %156 = arith.subf %143, %155 : vector<16x32xf32>
    %cst_47 = arith.constant 9.99999974E-6 : f32
    %157 = vector.broadcast %cst_47 : f32 to vector<16x1xf32>
    %158 = arith.addf %154, %157 : vector<16x1xf32>
    %159 = math.rsqrt %158 : vector<16x1xf32>
    %160 = vector.broadcast %159 : vector<16x1xf32> to vector<16x32xf32>
    %161 = arith.mulf %156, %160 : vector<16x32xf32>
    %162 = vector.broadcast %7 : vector<1x32xf32> to vector<16x32xf32>
    %163 = arith.mulf %161, %162 : vector<16x32xf32>
    %164 = vector.broadcast %8 : vector<1x32xf32> to vector<16x32xf32>
    %165 = arith.addf %163, %164 : vector<16x32xf32>
    %c0_48 = arith.constant 0 : index
    %c0_49 = arith.constant 0 : index
    %c0_50 = arith.constant 0 : index
    %166 = vector.load %arg6[%c0_48, %c0_49, %c0_50] : memref<1x32x128xbf16, #tpu.memory_space<vmem>>, vector<1x32x128xbf16>
    %167 = vector.shape_cast %166 : vector<1x32x128xbf16> to vector<32x128xbf16>
    %168 = arith.truncf %165 : vector<16x32xf32> to vector<16x32xbf16>
    %cst_51 = arith.constant dense<0.000000e+00> : vector<16x128xf32>
    %169 = tpu.matmul %168, %167, %cst_51 {dimension_numbers = #tpu.dot_dimension_numbers<[1], [0], [0], [1], [0, 0, 1, 1], [], []>} : vector<16x32xbf16>, vector<32x128xbf16>, vector<16x128xf32> -> vector<16x128xf32>
    %170 = vector.broadcast %12 : vector<1x128xf32> to vector<16x128xf32>
    %171 = arith.addf %169, %170 : vector<16x128xf32>
    %cst_52 = arith.constant 0.000000e+00 : f32
    %172 = vector.broadcast %cst_52 : f32 to vector<16x128xf32>
    %173 = arith.maximumf %171, %172 : vector<16x128xf32>
    %c0_53 = arith.constant 0 : index
    %c0_54 = arith.constant 0 : index
    %c0_55 = arith.constant 0 : index
    %174 = vector.load %arg7[%c0_53, %c0_54, %c0_55] : memref<1x128x32xbf16, #tpu.memory_space<vmem>>, vector<1x128x32xbf16>
    %175 = vector.shape_cast %174 : vector<1x128x32xbf16> to vector<128x32xbf16>
    %176 = arith.truncf %173 : vector<16x128xf32> to vector<16x128xbf16>
    %cst_56 = arith.constant dense<0.000000e+00> : vector<16x32xf32>
    %177 = tpu.matmul %176, %175, %cst_56 {dimension_numbers = #tpu.dot_dimension_numbers<[1], [0], [0], [1], [0, 0, 1, 1], [], []>} : vector<16x128xbf16>, vector<128x32xbf16>, vector<16x32xf32> -> vector<16x32xf32>
    %178 = vector.broadcast %11 : vector<1x32xf32> to vector<16x32xf32>
    %179 = arith.addf %177, %178 : vector<16x32xf32>
    %180 = arith.addf %143, %179 : vector<16x32xf32>
    %c0_57 = arith.constant 0 : index
    %c0_58 = arith.constant 0 : index
    %181 = vector.load %arg14[%c0_57, %c0_58] : memref<16x32xf32, #tpu.memory_space<vmem>>, vector<16x32xf32>
    tpu.vector_store %arg14[%c0_57, %c0_58], %180 {strides = array<i32>} : memref<16x32xf32, #tpu.memory_space<vmem>>, vector<16x32xf32>,
    %c1_i32 = arith.constant 1 : i32
    %182 = arith.cmpi eq, %arg1, %c1_i32 : i32
    %183 = arith.extui %182 : i1 to i32
    %c0_i32_59 = arith.constant 0 : i32
    %184 = arith.cmpi ne, %183, %c0_i32_59 : i32
    scf.if %184 {
      %185 = vector.shape_cast %180 : vector<16x32xf32> to vector<2x8x32xf32>
      %cst_60 = arith.constant dense<0xFF800000> : vector<2x32xf32>
      %186 = vector.multi_reduction <maximumf>, %185, %cst_60 [1] : vector<2x8x32xf32> to vector<2x32xf32>
      %c0_61 = arith.constant 0 : index
      %c0_62 = arith.constant 0 : index
      %187 = vector.load %arg9[%c0_61, %c0_62] : memref<1x32xf32, #tpu.memory_space<vmem>>, vector<1x32xf32>
      %c0_63 = arith.constant 0 : index
      %c0_64 = arith.constant 0 : index
      %188 = vector.load %arg10[%c0_63, %c0_64] : memref<1x32xf32, #tpu.memory_space<vmem>>, vector<1x32xf32>
      %cst_65 = arith.constant dense<0.000000e+00> : vector<2xf32>
      %189 = vector.multi_reduction <add>, %186, %cst_65 [1] : vector<2x32xf32> to vector<2xf32>
      %190 = vector.shape_cast %189 : vector<2xf32> to vector<2x1xf32>
      %cst_66 = arith.constant 3.200000e+01 : f32
      %191 = vector.broadcast %cst_66 : f32 to vector<2x1xf32>
      %192 = arith.divf %190, %191 : vector<2x1xf32>
      %193 = vector.broadcast %192 : vector<2x1xf32> to vector<2x32xf32>
      %194 = arith.subf %186, %193 : vector<2x32xf32>
      %195 = arith.mulf %194, %194 : vector<2x32xf32>
      %cst_67 = arith.constant dense<0.000000e+00> : vector<2xf32>
      %196 = vector.multi_reduction <add>, %195, %cst_67 [1] : vector<2x32xf32> to vector<2xf32>
      %197 = vector.shape_cast %196 : vector<2xf32> to vector<2x1xf32>
      %cst_68 = arith.constant 3.200000e+01 : f32
      %198 = vector.broadcast %cst_68 : f32 to vector<2x1xf32>
      %199 = arith.divf %197, %198 : vector<2x1xf32>
      %200 = vector.broadcast %192 : vector<2x1xf32> to vector<2x32xf32>
      %201 = arith.subf %186, %200 : vector<2x32xf32>
      %cst_69 = arith.constant 9.99999974E-6 : f32
      %202 = vector.broadcast %cst_69 : f32 to vector<2x1xf32>
      %203 = arith.addf %199, %202 : vector<2x1xf32>
      %204 = math.rsqrt %203 : vector<2x1xf32>
      %205 = vector.broadcast %204 : vector<2x1xf32> to vector<2x32xf32>
      %206 = arith.mulf %201, %205 : vector<2x32xf32>
      %207 = vector.broadcast %187 : vector<1x32xf32> to vector<2x32xf32>
      %208 = arith.mulf %206, %207 : vector<2x32xf32>
      %209 = vector.broadcast %188 : vector<1x32xf32> to vector<2x32xf32>
      %210 = arith.addf %208, %209 : vector<2x32xf32>
      %c0_70 = arith.constant 0 : index
      %c0_71 = arith.constant 0 : index
      %211 = vector.load %arg11[%c0_70, %c0_71] : memref<32x4xbf16, #tpu.memory_space<vmem>>, vector<32x4xbf16>
      %212 = arith.truncf %210 : vector<2x32xf32> to vector<2x32xbf16>
      %cst_72 = arith.constant dense<0.000000e+00> : vector<2x4xf32>
      %213 = tpu.matmul %212, %211, %cst_72 {dimension_numbers = #tpu.dot_dimension_numbers<[1], [0], [0], [1], [0, 0, 1, 1], [], []>} : vector<2x32xbf16>, vector<32x4xbf16>, vector<2x4xf32> -> vector<2x4xf32>
      %c0_73 = arith.constant 0 : index
      %c0_74 = arith.constant 0 : index
      %214 = vector.load %arg12[%c0_73, %c0_74] : memref<1x4xf32, #tpu.memory_space<vmem>>, vector<1x4xf32>
      %215 = vector.broadcast %214 : vector<1x4xf32> to vector<2x4xf32>
      %216 = arith.addf %213, %215 : vector<2x4xf32>
      %c0_75 = arith.constant 0 : index
      %c0_76 = arith.constant 0 : index
      %c0_77 = arith.constant 0 : index
      %217 = vector.load %arg13[%c0_75, %c0_76, %c0_77] : memref<1x2x4xf32, #tpu.memory_space<vmem>>, vector<1x2x4xf32>
      %218 = vector.shape_cast %217 : vector<1x2x4xf32> to vector<2x4xf32>
      %219 = vector.shape_cast %216 : vector<2x4xf32> to vector<1x2x4xf32>
      tpu.vector_store %arg13[%c0_75, %c0_76, %c0_77], %219 {strides = array<i32>} : memref<1x2x4xf32, #tpu.memory_space<vmem>>, vector<1x2x4xf32>,
    } else {
    }
    return
  }
  func.func @transform_0(%arg0: i32, %arg1: i32) -> (i32, i32, i32) {
    %c0_i32 = arith.constant 0 : i32
    %c0_i32_0 = arith.constant 0 : i32
    %c0_i32_1 = arith.constant 0 : i32
    return %arg0, %c0_i32, %c0_i32_0 : i32, i32, i32
  }
  func.func @transform_1(%arg0: i32, %arg1: i32) -> (i32, i32, i32) {
    %c0_i32 = arith.constant 0 : i32
    %c0_i32_0 = arith.constant 0 : i32
    %c0_i32_1 = arith.constant 0 : i32
    return %arg0, %c0_i32, %c0_i32_0 : i32, i32, i32
  }
  func.func @transform_2(%arg0: i32, %arg1: i32) -> (i32, i32, i32) {
    %c0_i32 = arith.constant 0 : i32
    %c0_i32_0 = arith.constant 0 : i32
    %c0_i32_1 = arith.constant 0 : i32
    return %arg1, %c0_i32, %c0_i32_0 : i32, i32, i32
  }
  func.func @transform_3(%arg0: i32, %arg1: i32) -> (i32, i32, i32) {
    %c0_i32 = arith.constant 0 : i32
    %c0_i32_0 = arith.constant 0 : i32
    %c0_i32_1 = arith.constant 0 : i32
    return %arg1, %c0_i32, %c0_i32_0 : i32, i32, i32
  }
  func.func @transform_4(%arg0: i32, %arg1: i32) -> (i32, i32, i32) {
    %c0_i32 = arith.constant 0 : i32
    %c0_i32_0 = arith.constant 0 : i32
    %c0_i32_1 = arith.constant 0 : i32
    return %arg1, %c0_i32, %c0_i32_0 : i32, i32, i32
  }
  func.func @transform_5(%arg0: i32, %arg1: i32) -> (i32, i32, i32) {
    %c0_i32 = arith.constant 0 : i32
    %c0_i32_0 = arith.constant 0 : i32
    %c0_i32_1 = arith.constant 0 : i32
    return %arg1, %c0_i32, %c0_i32_0 : i32, i32, i32
  }
  func.func @transform_6(%arg0: i32, %arg1: i32) -> (i32, i32, i32) {
    %c0_i32 = arith.constant 0 : i32
    %c0_i32_0 = arith.constant 0 : i32
    %c0_i32_1 = arith.constant 0 : i32
    return %arg1, %c0_i32, %c0_i32_0 : i32, i32, i32
  }
  func.func @transform_7(%arg0: i32, %arg1: i32) -> (i32, i32) {
    %c0_i32 = arith.constant 0 : i32
    %c0_i32_0 = arith.constant 0 : i32
    %c0_i32_1 = arith.constant 0 : i32
    return %c0_i32, %c0_i32_0 : i32, i32
  }
  func.func @transform_8(%arg0: i32, %arg1: i32) -> (i32, i32) {
    %c0_i32 = arith.constant 0 : i32
    %c0_i32_0 = arith.constant 0 : i32
    %c0_i32_1 = arith.constant 0 : i32
    return %c0_i32, %c0_i32_0 : i32, i32
  }
  func.func @transform_9(%arg0: i32, %arg1: i32) -> (i32, i32) {
    %c0_i32 = arith.constant 0 : i32
    %c0_i32_0 = arith.constant 0 : i32
    %c0_i32_1 = arith.constant 0 : i32
    return %c0_i32, %c0_i32_0 : i32, i32
  }
  func.func @transform_10(%arg0: i32, %arg1: i32) -> (i32, i32) {
    %c0_i32 = arith.constant 0 : i32
    %c0_i32_0 = arith.constant 0 : i32
    %c0_i32_1 = arith.constant 0 : i32
    return %c0_i32, %c0_i32_0 : i32, i32
  }
  func.func @transform_11(%arg0: i32, %arg1: i32) -> (i32, i32, i32) {
    %c0_i32 = arith.constant 0 : i32
    %c0_i32_0 = arith.constant 0 : i32
    %c0_i32_1 = arith.constant 0 : i32
    return %arg0, %c0_i32, %c0_i32_0 : i32, i32, i32
  }
}

</mosaic_0001>

<llo_original>
// kernel: tpu_custom_call.1
$region0: #{tpu_custom_call.1}
  #allocation0 [shape = 'u32[]', space=smem, size = 0x4, offset = 0x4, fixed_abs, tag = 'smem constant byte address 0x4 - core index']
  #allocation1 [shape = 'u32[144,128]{1,0:T(1,128)}', space=vmem, size = 0x12000, scoped, tag = 'internal scratch']
  #allocation2 [shape = 'f32[16,32]{1,0:T(8,128)}', space=vmem, size = 0x2000, scoped, tag = 'scratch operand']
  #allocation3 [shape = 'f32[16,32]{1,0:T(8,128)}', space=vmem, size = 0x2000, scoped, tag = 'scratch operand']
  %s0 = inlined_call_operand.vmem [shape: f32[2,8,32], index: 0, kind: input, shape index: {}]
  %s1 = inlined_call_operand.vmem [shape: f32[2,1,8], index: 1, kind: input, shape index: {}]
  %s2 = inlined_call_operand.vmem [shape: bf16[2,32,96], index: 2, kind: input, shape index: {}]
  %s3 = inlined_call_operand.vmem [shape: bf16[2,32,32], index: 3, kind: input, shape index: {}]
  %s4 = inlined_call_operand.vmem [shape: bf16[2,32,128], index: 4, kind: input, shape index: {}]
  %s5 = inlined_call_operand.vmem [shape: bf16[2,128,32], index: 5, kind: input, shape index: {}]
  %s6 = inlined_call_operand.vmem [shape: f32[2,8,128], index: 6, kind: input, shape index: {}]
  %s7 = inlined_call_operand.vmem [shape: f32[1,32], index: 7, kind: input, shape index: {}]
  %s8 = inlined_call_operand.vmem [shape: f32[1,32], index: 8, kind: input, shape index: {}]
  %s9 = inlined_call_operand.vmem [shape: bf16[32,4], index: 9, kind: input, shape index: {}]
  %s10 = inlined_call_operand.vmem [shape: f32[1,4], index: 10, kind: input, shape index: {}]
  %s11 = inlined_call_operand.hbm [shape: f32[1,2,4], index: 11, kind: output, shape index: {}]
  %s12 = sld [smem:[#allocation0]]
  $region85: #{tpu_custom_call.1} parent=0
    _
  %s14 = ssub.s32 1, %s12
  %s15 = scalar_select 0, %s14, %s12
  $region1: #{tpu_custom_call.1} parent=0
    #allocation4 [shape = 'u8[1024]{0}', space=vmem, size = 0x400, scoped, tag = 'output window, operand 0, single buffered']
    #allocation5 [shape = 's32[2]{0}', space=sflag, size = 0x8, scoped, tag = 'scoped memory for tpu_custom_call.1']
    %16 = vsyncpa [#allocation5], 0
    loop: start=0, step=1, limit=4
    $region2: #{tpu_custom_call.1} parent=1 // loop_pre_header
      _
    $region3: #{tpu_custom_call.1} parent=1 // loop_header
      %s18 = sphi 0, %s22
      %p19 = scmp.ge.s32.totalorder %s18, 4
      %s25 = sphi 0, %s37
      %s26 = sphi 0, %s33
      %s27 = sphi 0, %s25
      %s28 = sphi 0, %s26
      %s29 = sphi 0, %s27
      %s30 = sphi 0, %s28
      %s40 = sphi 0, %s42
      %s43 = sphi 0, %s40
      %s44 = sphi 0, %s43
      %s60 = sphi 0, %s44
      %s66 = sphi 0, %s68
      %s69 = sphi 0, %s66
      %s70 = sphi 0, %s69
      %s86 = sphi 0, %s70
      %s92 = sphi 0, %s94
      %s95 = sphi 0, %s92
      %s96 = sphi 0, %s95
      %s112 = sphi 0, %s96
      %s118 = sphi 0, %s120
      %s121 = sphi 0, %s118
      %s122 = sphi 0, %s121
      %s138 = sphi 0, %s122
      %s144 = sphi 0, %s146
      %s147 = sphi 0, %s144
      %s148 = sphi 0, %s147
      %s164 = sphi 0, %s148
      %s170 = sphi 0, %s172
      %s173 = sphi 0, %s170
      %s174 = sphi 0, %s173
      %s190 = sphi 0, %s174
      %s196 = sphi 0, %s198
      %s199 = sphi 0, %s196
      %s200 = sphi 0, %s199
      %s216 = sphi 0, %s200
      %s220 = sphi 0, %s220
      %s222 = sphi 0, %s220
      %s223 = sphi 0, %s222
      %s237 = sphi 0, %s223
      %s241 = sphi 0, %s241
      %s243 = sphi 0, %s241
      %s244 = sphi 0, %s243
      %s258 = sphi 0, %s244
      %s262 = sphi 0, %s262
      %s264 = sphi 0, %s262
      %s265 = sphi 0, %s264
      %s279 = sphi 0, %s265
      %s283 = sphi 0, %s283
      %s285 = sphi 0, %s283
      %s286 = sphi 0, %s285
      %s300 = sphi 0, %s286
      %s306 = sphi 0, %s308
      %s309 = sphi 0, %s306
      %s310 = sphi 0, %s309
      %s326 = sphi 0, %s310
    $region4: #{tpu_custom_call.1} parent=1 // loop_header_branch
      %21 = sbr.rel (%p19) target = $region8
    $region5: #{tpu_custom_call.1} parent=1 // loop_body
      %s23 = ssub.s32 %s18, 1
      %s24 = ssub.s32 %s18, 2
      %s31 = sadd.s32 1, %s26
      %p32 = scmp.ge.s32.totalorder %s31, 2
      %s33 = scalar_select %p32, 0, %s31
      %s34 = sadd.s32 1, %s25
      %s35 = scalar_select %p32, %s34, %s25
      %p36 = scmp.ge.s32.totalorder %s35, 1
      %s37 = scalar_select %p36, 0, %s35
      %s38 = ssub.s32 %s25, %s37
      %p39 = scmp.eq.s32.totalorder %s38, 0
      %s41 = sadd.s32 %s40, 1
      %s42 = scalar_select %p39, %s40, %s41
      %p45 = pneg %p39
      %p46 = scmp.eq.s32.totalorder %s18, 1
      %p47 = por %p45, %p46
      %p48 = scmp.ne.s32.totalorder %s40, %s43
      %p49 = scmp.eq.s32.totalorder %s18, 0
      %p50 = por %p48, %p49
      %p51 = scmp.ne.s32.totalorder %s40, %s43
      %p52 = scmp.eq.s32.totalorder %s23, 1
      %p53 = por %p51, %p52
      %p54 = scmp.ne.s32.totalorder %s43, %s44
      %p55 = scmp.eq.s32.totalorder %s23, 0
      %p56 = por %p54, %p55
      %p57 = scmp.ne.s32.totalorder %s43, %s44
      %p58 = scmp.eq.s32.totalorder %s24, 1
      %p59 = por %p57, %p58
      %p61 = scmp.ne.s32.totalorder %s44, %s60
      %p62 = scmp.eq.s32.totalorder %s24, 0
      %p63 = por %p61, %p62
      %s64 = ssub.s32 %s25, %s37
      %p65 = scmp.eq.s32.totalorder %s64, 0
      %s67 = sadd.s32 %s66, 1
      %s68 = scalar_select %p65, %s66, %s67
      %p71 = pneg %p65
      %p72 = scmp.eq.s32.totalorder %s18, 1
      %p73 = por %p71, %p72
      %p74 = scmp.ne.s32.totalorder %s66, %s69
      %p75 = scmp.eq.s32.totalorder %s18, 0
      %p76 = por %p74, %p75
      %p77 = scmp.ne.s32.totalorder %s66, %s69
      %p78 = scmp.eq.s32.totalorder %s23, 1
      %p79 = por %p77, %p78
      %p80 = scmp.ne.s32.totalorder %s69, %s70
      %p81 = scmp.eq.s32.totalorder %s23, 0
      %p82 = por %p80, %p81
      %p83 = scmp.ne.s32.totalorder %s69, %s70
      %p84 = scmp.eq.s32.totalorder %s24, 1
      %p85 = por %p83, %p84
      %p87 = scmp.ne.s32.totalorder %s70, %s86
      %p88 = scmp.eq.s32.totalorder %s24, 0
      %p89 = por %p87, %p88
      %s90 = ssub.s32 %s26, %s33
      %p91 = scmp.eq.s32.totalorder %s90, 0
      %s93 = sadd.s32 %s92, 1
      %s94 = scalar_select %p91, %s92, %s93
      %p97 = pneg %p91
      %p98 = scmp.eq.s32.totalorder %s18, 1
      %p99 = por %p97, %p98
      %p100 = scmp.ne.s32.totalorder %s92, %s95
      %p101 = scmp.eq.s32.totalorder %s18, 0
      %p102 = por %p100, %p101
      %p103 = scmp.ne.s32.totalorder %s92, %s95
      %p104 = scmp.eq.s32.totalorder %s23, 1
      %p105 = por %p103, %p104
      %p106 = scmp.ne.s32.totalorder %s95, %s96
      %p107 = scmp.eq.s32.totalorder %s23, 0
      %p108 = por %p106, %p107
      %p109 = scmp.ne.s32.totalorder %s95, %s96
      %p110 = scmp.eq.s32.totalorder %s24, 1
      %p111 = por %p109, %p110
      %p113 = scmp.ne.s32.totalorder %s96, %s112
      %p114 = scmp.eq.s32.totalorder %s24, 0
      %p115 = por %p113, %p114
      %s116 = ssub.s32 %s26, %s33
      %p117 = scmp.eq.s32.totalorder %s116, 0
      %s119 = sadd.s32 %s118, 1
      %s120 = scalar_select %p117, %s118, %s119
      %p123 = pneg %p117
      %p124 = scmp.eq.s32.totalorder %s18, 1
      %p125 = por %p123, %p124
      %p126 = scmp.ne.s32.totalorder %s118, %s121
      %p127 = scmp.eq.s32.totalorder %s18, 0
      %p128 = por %p126, %p127
      %p129 = scmp.ne.s32.totalorder %s118, %s121
      %p130 = scmp.eq.s32.totalorder %s23, 1
      %p131 = por %p129, %p130
      %p132 = scmp.ne.s32.totalorder %s121, %s122
      %p133 = scmp.eq.s32.totalorder %s23, 0
      %p134 = por %p132, %p133
      %p135 = scmp.ne.s32.totalorder %s121, %s122
      %p136 = scmp.eq.s32.totalorder %s24, 1
      %p137 = por %p135, %p136
      %p139 = scmp.ne.s32.totalorder %s122, %s138
      %p140 = scmp.eq.s32.totalorder %s24, 0
      %p141 = por %p139, %p140
      %s142 = ssub.s32 %s26, %s33
      %p143 = scmp.eq.s32.totalorder %s142, 0
      %s145 = sadd.s32 %s144, 1
      %s146 = scalar_select %p143, %s144, %s145
      %p149 = pneg %p143
      %p150 = scmp.eq.s32.totalorder %s18, 1
      %p151 = por %p149, %p150
      %p152 = scmp.ne.s32.totalorder %s144, %s147
      %p153 = scmp.eq.s32.totalorder %s18, 0
      %p154 = por %p152, %p153
      %p155 = scmp.ne.s32.totalorder %s144, %s147
      %p156 = scmp.eq.s32.totalorder %s23, 1
      %p157 = por %p155, %p156
      %p158 = scmp.ne.s32.totalorder %s147, %s148
      %p159 = scmp.eq.s32.totalorder %s23, 0
      %p160 = por %p158, %p159
      %p161 = scmp.ne.s32.totalorder %s147, %s148
      %p162 = scmp.eq.s32.totalorder %s24, 1
      %p163 = por %p161, %p162
      %p165 = scmp.ne.s32.totalorder %s148, %s164
      %p166 = scmp.eq.s32.totalorder %s24, 0
      %p167 = por %p165, %p166
      %s168 = ssub.s32 %s26, %s33
      %p169 = scmp.eq.s32.totalorder %s168, 0
      %s171 = sadd.s32 %s170, 1
      %s172 = scalar_select %p169, %s170, %s171
      %p175 = pneg %p169
      %p176 = scmp.eq.s32.totalorder %s18, 1
      %p177 = por %p175, %p176
      %p178 = scmp.ne.s32.totalorder %s170, %s173
      %p179 = scmp.eq.s32.totalorder %s18, 0
      %p180 = por %p178, %p179
      %p181 = scmp.ne.s32.totalorder %s170, %s173
      %p182 = scmp.eq.s32.totalorder %s23, 1
      %p183 = por %p181, %p182
      %p184 = scmp.ne.s32.totalorder %s173, %s174
      %p185 = scmp.eq.s32.totalorder %s23, 0
      %p186 = por %p184, %p185
      %p187 = scmp.ne.s32.totalorder %s173, %s174
      %p188 = scmp.eq.s32.totalorder %s24, 1
      %p189 = por %p187, %p188
      %p191 = scmp.ne.s32.totalorder %s174, %s190
      %p192 = scmp.eq.s32.totalorder %s24, 0
      %p193 = por %p191, %p192
      %s194 = ssub.s32 %s26, %s33
      %p195 = scmp.eq.s32.totalorder %s194, 0
      %s197 = sadd.s32 %s196, 1
      %s198 = scalar_select %p195, %s196, %s197
      %p201 = pneg %p195
      %p202 = scmp.eq.s32.totalorder %s18, 1
      %p203 = por %p201, %p202
      %p204 = scmp.ne.s32.totalorder %s196, %s199
      %p205 = scmp.eq.s32.totalorder %s18, 0
      %p206 = por %p204, %p205
      %p207 = scmp.ne.s32.totalorder %s196, %s199
      %p208 = scmp.eq.s32.totalorder %s23, 1
      %p209 = por %p207, %p208
      %p210 = scmp.ne.s32.totalorder %s199, %s200
      %p211 = scmp.eq.s32.totalorder %s23, 0
      %p212 = por %p210, %p211
      %p213 = scmp.ne.s32.totalorder %s199, %s200
      %p214 = scmp.eq.s32.totalorder %s24, 1
      %p215 = por %p213, %p214
      %p217 = scmp.ne.s32.totalorder %s200, %s216
      %p218 = scmp.eq.s32.totalorder %s24, 0
      %p219 = por %p217, %p218
      %s221 = sadd.s32 %s220, 1
      %p224 = scmp.eq.s32.totalorder %s18, 1
      %p225 = scmp.ne.s32.totalorder %s220, %s222
      %p226 = scmp.eq.s32.totalorder %s18, 0
      %p227 = por %p225, %p226
      %p228 = scmp.ne.s32.totalorder %s220, %s222
      %p229 = scmp.eq.s32.totalorder %s23, 1
      %p230 = por %p228, %p229
      %p231 = scmp.ne.s32.totalorder %s222, %s223
      %p232 = scmp.eq.s32.totalorder %s23, 0
      %p233 = por %p231, %p232
      %p234 = scmp.ne.s32.totalorder %s222, %s223
      %p235 = scmp.eq.s32.totalorder %s24, 1
      %p236 = por %p234, %p235
      %p238 = scmp.ne.s32.totalorder %s223, %s237
      %p239 = scmp.eq.s32.totalorder %s24, 0
      %p240 = por %p238, %p239
      %s242 = sadd.s32 %s241, 1
      %p245 = scmp.eq.s32.totalorder %s18, 1
      %p246 = scmp.ne.s32.totalorder %s241, %s243
      %p247 = scmp.eq.s32.totalorder %s18, 0
      %p248 = por %p246, %p247
      %p249 = scmp.ne.s32.totalorder %s241, %s243
      %p250 = scmp.eq.s32.totalorder %s23, 1
      %p251 = por %p249, %p250
      %p252 = scmp.ne.s32.totalorder %s243, %s244
      %p253 = scmp.eq.s32.totalorder %s23, 0
      %p254 = por %p252, %p253
      %p255 = scmp.ne.s32.totalorder %s243, %s244
      %p256 = scmp.eq.s32.totalorder %s24, 1
      %p257 = por %p255, %p256
      %p259 = scmp.ne.s32.totalorder %s244, %s258
      %p260 = scmp.eq.s32.totalorder %s24, 0
      %p261 = por %p259, %p260
      %s263 = sadd.s32 %s262, 1
      %p266 = scmp.eq.s32.totalorder %s18, 1
      %p267 = scmp.ne.s32.totalorder %s262, %s264
      %p268 = scmp.eq.s32.totalorder %s18, 0
      %p269 = por %p267, %p268
      %p270 = scmp.ne.s32.totalorder %s262, %s264
      %p271 = scmp.eq.s32.totalorder %s23, 1
      %p272 = por %p270, %p271
      %p273 = scmp.ne.s32.totalorder %s264, %s265
      %p274 = scmp.eq.s32.totalorder %s23, 0
      %p275 = por %p273, %p274
      %p276 = scmp.ne.s32.totalorder %s264, %s265
      %p277 = scmp.eq.s32.totalorder %s24, 1
      %p278 = por %p276, %p277
      %p280 = scmp.ne.s32.totalorder %s265, %s279
      %p281 = scmp.eq.s32.totalorder %s24, 0
      %p282 = por %p280, %p281
      %s284 = sadd.s32 %s283, 1
      %p287 = scmp.eq.s32.totalorder %s18, 1
      %p288 = scmp.ne.s32.totalorder %s283, %s285
      %p289 = scmp.eq.s32.totalorder %s18, 0
      %p290 = por %p288, %p289
      %p291 = scmp.ne.s32.totalorder %s283, %s285
      %p292 = scmp.eq.s32.totalorder %s23, 1
      %p293 = por %p291, %p292
      %p294 = scmp.ne.s32.totalorder %s285, %s286
      %p295 = scmp.eq.s32.totalorder %s23, 0
      %p296 = por %p294, %p295
      %p297 = scmp.ne.s32.totalorder %s285, %s286
      %p298 = scmp.eq.s32.totalorder %s24, 1
      %p299 = por %p297, %p298
      %p301 = scmp.ne.s32.totalorder %s286, %s300
      %p302 = scmp.eq.s32.totalorder %s24, 0
      %p303 = por %p301, %p302
      %s304 = ssub.s32 %s25, %s37
      %p305 = scmp.eq.s32.totalorder %s304, 0
      %s307 = sadd.s32 %s306, 1
      %s308 = scalar_select %p305, %s306, %s307
      %p311 = pneg %p305
      %p312 = scmp.eq.s32.totalorder %s18, 1
      %p313 = por %p311, %p312
      %p314 = scmp.ne.s32.totalorder %s306, %s309
      %p315 = scmp.eq.s32.totalorder %s18, 0
      %p316 = por %p314, %p315
      %p317 = scmp.ne.s32.totalorder %s306, %s309
      %p318 = scmp.eq.s32.totalorder %s23, 1
      %p319 = por %p317, %p318
      %p320 = scmp.ne.s32.totalorder %s309, %s310
      %p321 = scmp.eq.s32.totalorder %s23, 0
      %p322 = por %p320, %p321
      %p323 = scmp.ne.s32.totalorder %s309, %s310
      %p324 = scmp.eq.s32.totalorder %s24, 1
      %p325 = por %p323, %p324
      %p327 = scmp.ne.s32.totalorder %s310, %s326
      %p328 = scmp.eq.s32.totalorder %s24, 0
      %p329 = por %p327, %p328
      %p330 = scmp.le.s32.totalorder 1, %s18
      %p331 = scmp.lt.s32.totalorder %s18, 3
      %p332 = pnand %p330, %p331
      %p333 = pneg %p332
      // Predicated region
      $region9: #{tpu_custom_call.1} parent=5 // pred_check
        _
      $region10: #{tpu_custom_call.1} parent=5 // pred_check_branch
        %335 = sbr.rel (%p332) target = $region12
      $region11: #{tpu_custom_call.1} parent=5 // pred_region
        %s336 = ssub.s32 %s18, 1
        // Predicated region
        $region13: #{tpu_custom_call.1} parent=11 // pred_check
          %p337 = pneg %p56
        $region14: #{tpu_custom_call.1} parent=11 // pred_check_branch
          %339 = sbr.rel (%p337) target = $region16
        $region15: #{tpu_custom_call.1} parent=11 // pred_region
          %s340 = smul.u32 2, %s27
          %p341 = scmp.lt.s32.totalorder %s340, 1
          %s342 = scalar_select %p341, %s340, 1
          %s343 = smul.addr %s342, 8
          %s344 = scalar_lea.vmem %s0, %s343
          %s345 = smul.u32 2, %s27
        $region16: #{tpu_custom_call.1} parent=11 // pred_fallthru
          _
        // Predicated region
        $region17: #{tpu_custom_call.1} parent=11 // pred_check
          %p346 = pneg %p82
        $region18: #{tpu_custom_call.1} parent=11 // pred_check_branch
          %348 = sbr.rel (%p346) target = $region20
        $region19: #{tpu_custom_call.1} parent=11 // pred_region
          %s349 = smul.u32 2, %s27
          %p350 = scmp.lt.s32.totalorder %s349, 1
          %s351 = scalar_select %p350, %s349, 1
          %s352 = scalar_lea.vmem %s1, %s351
          %s353 = smul.u32 2, %s27
        $region20: #{tpu_custom_call.1} parent=11 // pred_fallthru
          _
        // Predicated region
        $region21: #{tpu_custom_call.1} parent=11 // pred_check
          %p354 = pneg %p233
        $region22: #{tpu_custom_call.1} parent=11 // pred_check_branch
          %356 = sbr.rel (%p354) target = $region24
        $region23: #{tpu_custom_call.1} parent=11 // pred_region
          _
        $region24: #{tpu_custom_call.1} parent=11 // pred_fallthru
          _
        // Predicated region
        $region25: #{tpu_custom_call.1} parent=11 // pred_check
          %p357 = pneg %p254
        $region26: #{tpu_custom_call.1} parent=11 // pred_check_branch
          %359 = sbr.rel (%p357) target = $region28
        $region27: #{tpu_custom_call.1} parent=11 // pred_region
          _
        $region28: #{tpu_custom_call.1} parent=11 // pred_fallthru
          _
        // Predicated region
        $region29: #{tpu_custom_call.1} parent=11 // pred_check
          %p360 = pneg %p275
        $region30: #{tpu_custom_call.1} parent=11 // pred_check_branch
          %362 = sbr.rel (%p360) target = $region32
        $region31: #{tpu_custom_call.1} parent=11 // pred_region
          _
        $region32: #{tpu_custom_call.1} parent=11 // pred_fallthru
          _
        // Predicated region
        $region33: #{tpu_custom_call.1} parent=11 // pred_check
          %p363 = pneg %p296
        $region34: #{tpu_custom_call.1} parent=11 // pred_check_branch
          %365 = sbr.rel (%p363) target = $region36
        $region35: #{tpu_custom_call.1} parent=11 // pred_region
          _
        $region36: #{tpu_custom_call.1} parent=11 // pred_fallthru
          _
      $region12: #{tpu_custom_call.1} parent=5 // pred_fallthru
        _
      %p366 = scmp.lt.s32.totalorder %s18, 2
      // Predicated region
      $region37: #{tpu_custom_call.1} parent=5 // pred_check
        %p367 = pneg %p366
      $region38: #{tpu_custom_call.1} parent=5 // pred_check_branch
        %369 = sbr.rel (%p367) target = $region40
      $region39: #{tpu_custom_call.1} parent=5 // pred_region
        // Predicated region
        $region41: #{tpu_custom_call.1} parent=39 // pred_check
          %p370 = pneg %p102
        $region42: #{tpu_custom_call.1} parent=39 // pred_check_branch
          %372 = sbr.rel (%p370) target = $region44
        $region43: #{tpu_custom_call.1} parent=39 // pred_region
          %p373 = scmp.lt.s32.totalorder %s26, 1
          %s374 = scalar_select %p373, %s26, 1
          %s375 = smul.addr %s374, 4
          %s376 = smul.addr %s375, 4
          %s377 = scalar_lea.vmem %s2, %s376
        $region44: #{tpu_custom_call.1} parent=39 // pred_fallthru
          _
        // Predicated region
        $region45: #{tpu_custom_call.1} parent=39 // pred_check
          %p378 = pneg %p128
        $region46: #{tpu_custom_call.1} parent=39 // pred_check_branch
          %380 = sbr.rel (%p378) target = $region48
        $region47: #{tpu_custom_call.1} parent=39 // pred_region
          %p381 = scmp.lt.s32.totalorder %s26, 1
          %s382 = scalar_select %p381, %s26, 1
          %s383 = smul.addr %s382, 4
          %s384 = smul.addr %s383, 4
          %s385 = scalar_lea.vmem %s3, %s384
        $region48: #{tpu_custom_call.1} parent=39 // pred_fallthru
          _
        // Predicated region
        $region49: #{tpu_custom_call.1} parent=39 // pred_check
          %p386 = pneg %p154
        $region50: #{tpu_custom_call.1} parent=39 // pred_check_branch
          %388 = sbr.rel (%p386) target = $region52
        $region51: #{tpu_custom_call.1} parent=39 // pred_region
          %p389 = scmp.lt.s32.totalorder %s26, 1
          %s390 = scalar_select %p389, %s26, 1
          %s391 = smul.addr %s390, 4
          %s392 = smul.addr %s391, 4
          %s393 = scalar_lea.vmem %s4, %s392
        $region52: #{tpu_custom_call.1} parent=39 // pred_fallthru
          _
        // Predicated region
        $region53: #{tpu_custom_call.1} parent=39 // pred_check
          %p394 = pneg %p180
        $region54: #{tpu_custom_call.1} parent=39 // pred_check_branch
          %396 = sbr.rel (%p394) target = $region56
        $region55: #{tpu_custom_call.1} parent=39 // pred_region
          %p397 = scmp.lt.s32.totalorder %s26, 1
          %s398 = scalar_select %p397, %s26, 1
          %s399 = smul.addr %s398, 16
          %s400 = smul.addr %s399, 4
          %s401 = scalar_lea.vmem %s5, %s400
        $region56: #{tpu_custom_call.1} parent=39 // pred_fallthru
          _
        // Predicated region
        $region57: #{tpu_custom_call.1} parent=39 // pred_check
          %p402 = pneg %p206
        $region58: #{tpu_custom_call.1} parent=39 // pred_check_branch
          %404 = sbr.rel (%p402) target = $region60
        $region59: #{tpu_custom_call.1} parent=39 // pred_region
          %p405 = scmp.lt.s32.totalorder %s26, 1
          %s406 = scalar_select %p405, %s26, 1
          %s407 = smul.addr %s406, 8
          %s408 = scalar_lea.vmem %s6, %s407
        $region60: #{tpu_custom_call.1} parent=39 // pred_fallthru
          _
      $region40: #{tpu_custom_call.1} parent=5 // pred_fallthru
        _
      %p409 = scmp.le.s32.totalorder 1, %s18
      %p410 = scmp.lt.s32.totalorder %s18, 3
      %p411 = pnand %p409, %p410
      %p412 = pneg %p411
      // Predicated region
      $region61: #{tpu_custom_call.1} parent=5 // pred_check
        _
      $region62: #{tpu_custom_call.1} parent=5 // pred_check_branch
        %414 = sbr.rel (%p411) target = $region64
      $region63: #{tpu_custom_call.1} parent=5 // pred_region
        %s415 = ssub.s32 %s18, 1
        %s416 = smul.u32 2, %s27
        %p417 = scmp.lt.s32.totalorder %s416, 1
        %s418 = scalar_select %p417, %s416, 1
        %s419 = smul.addr %s418, 8
        %s420 = scalar_lea.vmem %s0, %s419
        %p421 = pneg %p56
        %p422 = pneg %p53
        %s423 = smul.u32 2, %s27
        %p424 = scmp.lt.s32.totalorder %s423, 1
        %s425 = scalar_select %p424, %s423, 1
        %s426 = scalar_lea.vmem %s1, %s425
        %p427 = pneg %p82
        %p428 = pneg %p79
        %p429 = scmp.lt.s32.totalorder %s28, 1
        %s430 = scalar_select %p429, %s28, 1
        %s431 = smul.addr %s430, 4
        %s432 = smul.addr %s431, 4
        %s433 = scalar_lea.vmem %s2, %s432
        %p434 = pneg %p108
        %p435 = pneg %p105
        %p436 = scmp.lt.s32.totalorder %s28, 1
        %s437 = scalar_select %p436, %s28, 1
        %s438 = smul.addr %s437, 4
        %s439 = smul.addr %s438, 4
        %s440 = scalar_lea.vmem %s3, %s439
        %p441 = pneg %p134
        %p442 = pneg %p131
        %p443 = scmp.lt.s32.totalorder %s28, 1
        %s444 = scalar_select %p443, %s28, 1
        %s445 = smul.addr %s444, 4
        %s446 = smul.addr %s445, 4
        %s447 = scalar_lea.vmem %s4, %s446
        %p448 = pneg %p160
        %p449 = pneg %p157
        %p450 = scmp.lt.s32.totalorder %s28, 1
        %s451 = scalar_select %p450, %s28, 1
        %s452 = smul.addr %s451, 16
        %s453 = smul.addr %s452, 4
        %s454 = scalar_lea.vmem %s5, %s453
        %p455 = pneg %p186
        %p456 = pneg %p183
        %p457 = scmp.lt.s32.totalorder %s28, 1
        %s458 = scalar_select %p457, %s28, 1
        %s459 = smul.addr %s458, 8
        %s460 = scalar_lea.vmem %s6, %s459
        %p461 = pneg %p212
        %p462 = pneg %p209
        %p463 = pneg %p233
        %p464 = pneg %p230
        %p465 = pneg %p254
        %p466 = pneg %p251
        %p467 = pneg %p275
        %p468 = pneg %p272
        %p469 = pneg %p296
        %p470 = pneg %p293
        %p471 = pneg %p322
        %p472 = pneg %p319
        %s473 = smul.u32 2, %s27
        %p474 = scmp.lt.s32.totalorder %s473, 1
        %s475 = scalar_select %p474, %s473, 1
        %s476 = smul.addr %s475, 8
        %s477 = scalar_lea.vmem %s0, %s476
        %s478 = smul.u32 2, %s27
        %s479 = smul.u32 2, %s27
        %p480 = scmp.lt.s32.totalorder %s479, 1
        %s481 = scalar_select %p480, %s479, 1
        %s482 = scalar_lea.vmem %s1, %s481
        %s483 = smul.u32 2, %s27
        %p484 = scmp.lt.s32.totalorder %s28, 1
        %s485 = scalar_select %p484, %s28, 1
        %s486 = smul.addr %s485, 4
        %s487 = smul.addr %s486, 4
        %s488 = scalar_lea.vmem %s2, %s487
        %p489 = scmp.lt.s32.totalorder %s28, 1
        %s490 = scalar_select %p489, %s28, 1
        %s491 = smul.addr %s490, 4
        %s492 = smul.addr %s491, 4
        %s493 = scalar_lea.vmem %s3, %s492
        %p494 = scmp.lt.s32.totalorder %s28, 1
        %s495 = scalar_select %p494, %s28, 1
        %s496 = smul.addr %s495, 4
        %s497 = smul.addr %s496, 4
        %s498 = scalar_lea.vmem %s4, %s497
        %p499 = scmp.lt.s32.totalorder %s28, 1
        %s500 = scalar_select %p499, %s28, 1
        %s501 = smul.addr %s500, 16
        %s502 = smul.addr %s501, 4
        %s503 = scalar_lea.vmem %s5, %s502
        %p504 = scmp.lt.s32.totalorder %s28, 1
        %s505 = scalar_select %p504, %s28, 1
        %s506 = smul.addr %s505, 8
        %s507 = scalar_lea.vmem %s6, %s506
        %p509 = scmp.eq.s32.totalorder %s28, 0
        // Predicated region
        $region65: #{tpu_custom_call.1} parent=63 // pred_check
          %p510 = pneg %p509
        $region66: #{tpu_custom_call.1} parent=63 // pred_check_branch
          %512 = sbr.rel (%p510) target = $region68
        $region67: #{tpu_custom_call.1} parent=63 // pred_region
          %v513 = vld [vmem:[%s477] sm:$0xff]
          %v514 = vld [vmem:[%s477 + $0x8] sm:$0xff]
          %vm515 = vcmask 261120
          %516 = vst.msk [vmem:[#allocation2] sm:$0xff] %vm515, %v513
          %517 = vst.msk [vmem:[#allocation2 + $0x8] sm:$0xff] %vm515, %v514
        $region68: #{tpu_custom_call.1} parent=63 // pred_fallthru
          _
        %v518 = vld [vmem:[%s507] sm:$0xff]
        %v519 = vld [vmem:[#allocation2] sm:$0xff]
        %v520 = vld [vmem:[#allocation2 + $0x8] sm:$0xff]
        %vm521 = vcmask 261120
        %v522 = vsel %vm521, %v519, 0.0
        %523 = vadd.xlane.f32.xlu0 %v522
        %v524 = vpop.xlane.xlu0 %523
        %v525 = vsel %vm521, %v520, 0.0
        %526 = vadd.xlane.f32.xlu0 %v525
        %v527 = vpop.xlane.xlu0 %526
        %v528 = vrcp.pop 32.0
        %v529 = vmul.f32 %v524, %v528
        %v530 = vmul.f32 %v527, %v528
        %v531 = vsub.f32 %v519, %v529
        %v532 = vsub.f32 %v520, %v530
        %v533 = vmul.f32 %v531, %v531
        %v534 = vmul.f32 %v532, %v532
        %v535 = vsel %vm521, %v533, 0.0
        %536 = vadd.xlane.f32.xlu0 %v535
        %v537 = vpop.xlane.xlu0 %536
        %v538 = vsel %vm521, %v534, 0.0
        %539 = vadd.xlane.f32.xlu0 %v538
        %v540 = vpop.xlane.xlu0 %539
        %v541 = vmul.f32 %v537, %v528
        %v542 = vmul.f32 %v540, %v528
        %v543 = vadd.f32 %v541, 1e-05
        %v544 = vadd.f32 %v542, 1e-05
        %v545 = vrsqrt.pop %v543
        %v546 = vrsqrt.pop %v544
        %v547 = vmul.f32 %v531, %v545
        %v548 = vmul.f32 %v532, %v546
        %v549 = vlaneseq
        %v550 = vshrl.u32 %v549, 7
        %v551 = vsub.s32 0, %v550
        %v552 = vrot.slane %v518, %v551
        %v553 = vmul.f32 %v547, %v552
        %v554 = vmul.f32 %v548, %v552
        %v555 = vlaneseq
        %v556 = vshrl.u32 %v555, 7
        %v557 = vsub.s32 1, %v556
        %v558 = vrot.slane %v518, %v557
        %v559 = vadd.f32 %v553, %v558
        %v560 = vadd.f32 %v554, %v558
        %v561 = vld [vmem:[%s488] sm:$0xf]
        %v562 = vld [vmem:[%s488 + $0x4] sm:$0xf]
        %v563 = vld [vmem:[%s488 + $0x8] sm:$0xf]
        %v564 = vld [vmem:[%s488 + $0xc] sm:$0xf]
        %v565 = vpack.c.bf16 %v560, %v559
        %v566 = vlaneseq
        %v567 = vshrl.u32 %v566, 7
        %v568 = vsub.s32 4, %v567
        %v569 = vrot.slane %v518, %v568
        %v574 = vunpack.c.l.b16 %v561
        %v575 = vunpack.c.l.b16 %v562
        %v576 = vunpack.c.l.b16 %v563
        %v577 = vunpack.c.l.b16 %v564
        %v578 = vpack.c.b16 %v575, %v574
        %v579 = vpack.c.b16 %v577, %v576
        %v583 = vsel %vm521, %v565, 0
        %585 = vmatprep.subr.bf16.mxu0 0
        %586 = vmatpush1.bf16.msra.mxu0 0
        %587 = vmatprep.subr.bf16.mxu0 0
        %588 = vmatpush1.bf16.msra.mxu0 0
        %589 = vmatprep.subr.bf16.mxu0 0
        %590 = vmatpush1.bf16.msra.mxu0 0
        %591 = vmatprep.subr.bf16.mxu0 0
        %592 = vmatpush1.bf16.msra.mxu0 0
        %593 = vmatprep.subr.bf16.mxu0 0
        %594 = vmatpush1.bf16.msra.mxu0 0
        %595 = vmatprep.subr.bf16.mxu0 0
        %596 = vmatpush1.bf16.msra.mxu0 0
        %597 = vmatprep.subr.bf16.mxu0 0
        %598 = vmatpush1.bf16.msra.mxu0 %v579
        %599 = vmatprep.subr.bf16.mxu0 0
        %600 = vmatpush1.bf16.msra.mxu0 %v578
        %601 = vmatprep.subr.bf16.mxu0 0
        %602 = vmatpush2.bf16.msra.mxu0 0
        %603 = vmatprep.subr.bf16.mxu0 0
        %604 = vmatpush2.bf16.msra.mxu0 0
        %605 = vmatprep.subr.bf16.mxu0 0
        %606 = vmatpush2.bf16.msra.mxu0 0
        %607 = vmatprep.subr.bf16.mxu0 0
        %608 = vmatpush2.bf16.msra.mxu0 0
        %609 = vmatprep.subr.bf16.mxu0 0
        %610 = vmatpush2.bf16.msra.mxu0 0
        %611 = vmatprep.subr.bf16.mxu0 0
        %612 = vmatpush2.bf16.msra.mxu0 0
        %613 = vmatprep.subr.bf16.mxu0 0
        %614 = vmatpush2.bf16.msra.mxu0 0
        %615 = vmatprep.subr.bf16.mxu0 0
        %616 = vmatpush2.bf16.msra.mxu0 0
        %617 = vmatprep.mubr.bf16.mxu0 0
        %618 = vmatmul.mubr.bf16.gmra.mxu0 %v583
        %v619 = vpop.f32.mrf.mxu0
        %v620 = vadd.f32 %v569, %v619
        %v621 = vpop.f32.mrf.mxu0
        %v622 = vpop.f32.mrf.mxu0
        %v623 = vadd.f32 %v569, %v622
        %v624 = vpop.f32.mrf.mxu0
        %625 = vdwg.mxu0
        %v626 = vld [vmem:[%s482] sm:$0x1]
        %v627 = vld [vmem:[%s482 + $0x1] sm:$0x1]
        %v628 = vpack.c.bf16 %v620, %v620
        %v629 = vpack.c.bf16 %v623, %v623
        %v632 = vlaneseq
        %v633 = vshrl.u32 %v632, 7
        %v634 = vsub.s32 0, %v633
        %v635 = vrot.slane %v626, %v634
        %v636 = vlaneseq
        %v637 = vshrl.u32 %v636, 7
        %v638 = vsub.s32 0, %v637
        %v639 = vrot.slane %v627, %v638
        %643 = vrot.lane.b32.xlu0 %v628, 96
        %v644 = vpop.permute.xlu0 %643
        %vm645 = vcmask 64512
        %v647 = vsel %vm645, %v628, 0
        %v650 = vsel %vm645, %v644, 0
        %652 = vmatprep.subr.bf16.mxu0 0
        %653 = vmatpush1.bf16.xpose.msra.mxu0 0
        %654 = vmatprep.subr.bf16.mxu0 0
        %655 = vmatpush1.bf16.xpose.msra.mxu0 0
        %656 = vmatprep.subr.bf16.mxu0 0
        %657 = vmatpush1.bf16.xpose.msra.mxu0 0
        %658 = vmatprep.subr.bf16.mxu0 0
        %659 = vmatpush1.bf16.xpose.msra.mxu0 0
        %660 = vmatprep.subr.bf16.mxu0 0
        %661 = vmatpush1.bf16.xpose.msra.mxu0 0
        %662 = vmatprep.subr.bf16.mxu0 0
        %663 = vmatpush1.bf16.xpose.msra.mxu0 0
        %664 = vmatprep.subr.bf16.mxu0 0
        %665 = vmatpush1.bf16.xpose.msra.mxu0 0
        %666 = vmatprep.subr.bf16.mxu0 0
        %667 = vmatpush1.bf16.xpose.msra.mxu0 %v650
        %668 = vmatprep.subr.bf16.mxu0 0
        %669 = vmatpush2.bf16.xpose.msra.mxu0 0
        %670 = vmatprep.subr.bf16.mxu0 0
        %671 = vmatpush2.bf16.xpose.msra.mxu0 0
        %672 = vmatprep.subr.bf16.mxu0 0
        %673 = vmatpush2.bf16.xpose.msra.mxu0 0
        %674 = vmatprep.subr.bf16.mxu0 0
        %675 = vmatpush2.bf16.xpose.msra.mxu0 0
        %676 = vmatprep.subr.bf16.mxu0 0
        %677 = vmatpush2.bf16.xpose.msra.mxu0 0
        %678 = vmatprep.subr.bf16.mxu0 0
        %679 = vmatpush2.bf16.xpose.msra.mxu0 0
        %680 = vmatprep.subr.bf16.mxu0 0
        %681 = vmatpush2.bf16.xpose.msra.mxu0 0
        %682 = vmatprep.subr.bf16.mxu0 0
        %683 = vmatpush2.bf16.xpose.msra.mxu0 0
        %684 = vmatprep.mubr.bf16.mxu0 0
        %685 = vmatmul.mubr.bf16.gmra.mxu0 %v647
        %v686 = vpop.f32.mrf.mxu0
        %v687 = vadd.f32 %v635, %v686
        %v688 = vpop.f32.mrf.mxu0
        %v689 = vpop.f32.mrf.mxu0
        %v690 = vpop.f32.mrf.mxu0
        %691 = vdwg.mxu0
        %693 = vrot.lane.b32.xlu0 %v629, 96
        %v694 = vpop.permute.xlu0 %693
        %v696 = vsel %vm645, %v629, 0
        %v699 = vsel %vm645, %v694, 0
        %701 = vmatprep.subr.bf16.mxu0 0
        %702 = vmatpush1.bf16.xpose.msra.mxu0 0
        %703 = vmatprep.subr.bf16.mxu0 0
        %704 = vmatpush1.bf16.xpose.msra.mxu0 0
        %705 = vmatprep.subr.bf16.mxu0 0
        %706 = vmatpush1.bf16.xpose.msra.mxu0 0
        %707 = vmatprep.subr.bf16.mxu0 0
        %708 = vmatpush1.bf16.xpose.msra.mxu0 0
        %709 = vmatprep.subr.bf16.mxu0 0
        %710 = vmatpush1.bf16.xpose.msra.mxu0 0
        %711 = vmatprep.subr.bf16.mxu0 0
        %712 = vmatpush1.bf16.xpose.msra.mxu0 0
        %713 = vmatprep.subr.bf16.mxu0 0
        %714 = vmatpush1.bf16.xpose.msra.mxu0 0
        %715 = vmatprep.subr.bf16.mxu0 0
        %716 = vmatpush1.bf16.xpose.msra.mxu0 %v699
        %717 = vmatprep.subr.bf16.mxu0 0
        %718 = vmatpush2.bf16.xpose.msra.mxu0 0
        %719 = vmatprep.subr.bf16.mxu0 0
        %720 = vmatpush2.bf16.xpose.msra.mxu0 0
        %721 = vmatprep.subr.bf16.mxu0 0
        %722 = vmatpush2.bf16.xpose.msra.mxu0 0
        %723 = vmatprep.subr.bf16.mxu0 0
        %724 = vmatpush2.bf16.xpose.msra.mxu0 0
        %725 = vmatprep.subr.bf16.mxu0 0
        %726 = vmatpush2.bf16.xpose.msra.mxu0 0
        %727 = vmatprep.subr.bf16.mxu0 0
        %728 = vmatpush2.bf16.xpose.msra.mxu0 0
        %729 = vmatprep.subr.bf16.mxu0 0
        %730 = vmatpush2.bf16.xpose.msra.mxu0 0
        %731 = vmatprep.subr.bf16.mxu0 0
        %732 = vmatpush2.bf16.xpose.msra.mxu0 0
        %733 = vmatprep.mubr.bf16.mxu0 0
        %734 = vmatmul.mubr.bf16.gmra.mxu0 %v696
        %v735 = vpop.f32.mrf.mxu0
        %v736 = vadd.f32 %v639, %v735
        %v737 = vpop.f32.mrf.mxu0
        %v738 = vpop.f32.mrf.mxu0
        %v739 = vpop.f32.mrf.mxu0
        %740 = vdwg.mxu0
        %v741 = vsel %vm645, %v687, -inf
        %742 = vmax.xlane.f32.xlu0 %v741
        %v743 = vpop.xlane.xlu0 %742
        %v744 = vsel %vm645, %v736, -inf
        %745 = vmax.xlane.f32.xlu0 %v744
        %v746 = vpop.xlane.xlu0 %745
        %v747 = vsub.f32 %v687, %v743
        %v748 = vsub.f32 %v736, %v746
        %v749 = vmul.f32 %v747, 1.442695
        %v750 = vpow.pop %v749
        %v751 = vmul.f32 %v748, 1.442695
        %v752 = vpow.pop %v751
        %v753 = vsel %vm645, %v750, 0.0
        %754 = vadd.xlane.f32.xlu0 %v753
        %v755 = vpop.xlane.xlu0 %754
        %v756 = vsel %vm645, %v752, 0.0
        %757 = vadd.xlane.f32.xlu0 %v756
        %v758 = vpop.xlane.xlu0 %757
        %v759 = vrcp.pop %v755
        %v760 = vrcp.pop %v758
        %v761 = vmul.f32 %v750, %v759
        %v762 = vmul.f32 %v752, %v760
        %v763 = vpack.c.bf16 %v761, %v761
        %v764 = vpack.c.bf16 %v762, %v762
        %765 = vrot.lane.b32.xlu0 %v628, 64
        %v766 = vpop.permute.xlu0 %765
        %v768 = vsel %vm645, %v763, 0
        %vm770 = vcmask 1043456
        %v772 = vsel %vm770, %v766, 0
        %774 = vmatprep.subr.bf16.mxu0 0
        %775 = vmatpush1.bf16.msra.mxu0 0
        %776 = vmatprep.subr.bf16.mxu0 0
        %777 = vmatpush1.bf16.msra.mxu0 0
        %778 = vmatprep.subr.bf16.mxu0 0
        %779 = vmatpush1.bf16.msra.mxu0 0
        %780 = vmatprep.subr.bf16.mxu0 0
        %781 = vmatpush1.bf16.msra.mxu0 0
        %782 = vmatprep.subr.bf16.mxu0 0
        %783 = vmatpush1.bf16.msra.mxu0 0
        %784 = vmatprep.subr.bf16.mxu0 0
        %785 = vmatpush1.bf16.msra.mxu0 0
        %786 = vmatprep.subr.bf16.mxu0 0
        %787 = vmatpush1.bf16.msra.mxu0 0
        %788 = vmatprep.subr.bf16.mxu0 0
        %789 = vmatpush1.bf16.msra.mxu0 %v772
        %790 = vmatprep.subr.bf16.mxu0 0
        %791 = vmatpush2.bf16.msra.mxu0 0
        %792 = vmatprep.subr.bf16.mxu0 0
        %793 = vmatpush2.bf16.msra.mxu0 0
        %794 = vmatprep.subr.bf16.mxu0 0
        %795 = vmatpush2.bf16.msra.mxu0 0
        %796 = vmatprep.subr.bf16.mxu0 0
        %797 = vmatpush2.bf16.msra.mxu0 0
        %798 = vmatprep.subr.bf16.mxu0 0
        %799 = vmatpush2.bf16.msra.mxu0 0
        %800 = vmatprep.subr.bf16.mxu0 0
        %801 = vmatpush2.bf16.msra.mxu0 0
        %802 = vmatprep.subr.bf16.mxu0 0
        %803 = vmatpush2.bf16.msra.mxu0 0
        %804 = vmatprep.subr.bf16.mxu0 0
        %805 = vmatpush2.bf16.msra.mxu0 0
        %806 = vmatprep.mubr.bf16.mxu0 0
        %807 = vmatmul.mubr.bf16.gmra.mxu0 %v768
        %v808 = vpop.f32.mrf.mxu0
        %v809 = vadd.f32 0.0, %v808
        %v810 = vpop.f32.mrf.mxu0
        %v811 = vpop.f32.mrf.mxu0
        %v812 = vpop.f32.mrf.mxu0
        %813 = vdwg.mxu0
        %814 = vrot.lane.b32.xlu0 %v629, 64
        %v815 = vpop.permute.xlu0 %814
        %v817 = vsel %vm645, %v764, 0
        %v820 = vsel %vm770, %v815, 0
        %822 = vmatprep.subr.bf16.mxu0 0
        %823 = vmatpush1.bf16.msra.mxu0 0
        %824 = vmatprep.subr.bf16.mxu0 0
        %825 = vmatpush1.bf16.msra.mxu0 0
        %826 = vmatprep.subr.bf16.mxu0 0
        %827 = vmatpush1.bf16.msra.mxu0 0
        %828 = vmatprep.subr.bf16.mxu0 0
        %829 = vmatpush1.bf16.msra.mxu0 0
        %830 = vmatprep.subr.bf16.mxu0 0
        %831 = vmatpush1.bf16.msra.mxu0 0
        %832 = vmatprep.subr.bf16.mxu0 0
        %833 = vmatpush1.bf16.msra.mxu0 0
        %834 = vmatprep.subr.bf16.mxu0 0
        %835 = vmatpush1.bf16.msra.mxu0 0
        %836 = vmatprep.subr.bf16.mxu0 0
        %837 = vmatpush1.bf16.msra.mxu0 %v820
        %838 = vmatprep.subr.bf16.mxu0 0
        %839 = vmatpush2.bf16.msra.mxu0 0
        %840 = vmatprep.subr.bf16.mxu0 0
        %841 = vmatpush2.bf16.msra.mxu0 0
        %842 = vmatprep.subr.bf16.mxu0 0
        %843 = vmatpush2.bf16.msra.mxu0 0
        %844 = vmatprep.subr.bf16.mxu0 0
        %845 = vmatpush2.bf16.msra.mxu0 0
        %846 = vmatprep.subr.bf16.mxu0 0
        %847 = vmatpush2.bf16.msra.mxu0 0
        %848 = vmatprep.subr.bf16.mxu0 0
        %849 = vmatpush2.bf16.msra.mxu0 0
        %850 = vmatprep.subr.bf16.mxu0 0
        %851 = vmatpush2.bf16.msra.mxu0 0
        %852 = vmatprep.subr.bf16.mxu0 0
        %853 = vmatpush2.bf16.msra.mxu0 0
        %854 = vmatprep.mubr.bf16.mxu0 0
        %855 = vmatmul.mubr.bf16.gmra.mxu0 %v817
        %v856 = vpop.f32.mrf.mxu0
        %v857 = vadd.f32 0.0, %v856
        %v858 = vpop.f32.mrf.mxu0
        %v859 = vpop.f32.mrf.mxu0
        %v860 = vpop.f32.mrf.mxu0
        %861 = vdwg.mxu0
        %862 = vst.msk [vmem:[#allocation3] sm:$0xff] %vm645, %v809
        %863 = vst.msk [vmem:[#allocation3 + $0x8] sm:$0xff] %vm645, %v857
        %864 = vrot.lane.b32.xlu0 %v628, 120
        %v865 = vpop.permute.xlu0 %864
        %866 = vrot.lane.b32.xlu0 %v628, 88
        %v867 = vpop.permute.xlu0 %866
        %v869 = vsel %vm645, %v865, 0
        %v872 = vsel %vm645, %v867, 0
        %874 = vmatprep.subr.bf16.mxu0 0
        %875 = vmatpush1.bf16.xpose.msra.mxu0 0
        %876 = vmatprep.subr.bf16.mxu0 0
        %877 = vmatpush1.bf16.xpose.msra.mxu0 0
        %878 = vmatprep.subr.bf16.mxu0 0
        %879 = vmatpush1.bf16.xpose.msra.mxu0 0
        %880 = vmatprep.subr.bf16.mxu0 0
        %881 = vmatpush1.bf16.xpose.msra.mxu0 0
        %882 = vmatprep.subr.bf16.mxu0 0
        %883 = vmatpush1.bf16.xpose.msra.mxu0 0
        %884 = vmatprep.subr.bf16.mxu0 0
        %885 = vmatpush1.bf16.xpose.msra.mxu0 0
        %886 = vmatprep.subr.bf16.mxu0 0
        %887 = vmatpush1.bf16.xpose.msra.mxu0 0
        %888 = vmatprep.subr.bf16.mxu0 0
        %889 = vmatpush1.bf16.xpose.msra.mxu0 %v872
        %890 = vmatprep.subr.bf16.mxu0 0
        %891 = vmatpush2.bf16.xpose.msra.mxu0 0
        %892 = vmatprep.subr.bf16.mxu0 0
        %893 = vmatpush2.bf16.xpose.msra.mxu0 0
        %894 = vmatprep.subr.bf16.mxu0 0
        %895 = vmatpush2.bf16.xpose.msra.mxu0 0
        %896 = vmatprep.subr.bf16.mxu0 0
        %897 = vmatpush2.bf16.xpose.msra.mxu0 0
        %898 = vmatprep.subr.bf16.mxu0 0
        %899 = vmatpush2.bf16.xpose.msra.mxu0 0
        %900 = vmatprep.subr.bf16.mxu0 0
        %901 = vmatpush2.bf16.xpose.msra.mxu0 0
        %902 = vmatprep.subr.bf16.mxu0 0
        %903 = vmatpush2.bf16.xpose.msra.mxu0 0
        %904 = vmatprep.subr.bf16.mxu0 0
        %905 = vmatpush2.bf16.xpose.msra.mxu0 0
        %906 = vmatprep.mubr.bf16.mxu0 0
        %907 = vmatmul.mubr.bf16.gmra.mxu0 %v869
        %v908 = vpop.f32.mrf.mxu0
        %v909 = vadd.f32 %v635, %v908
        %v910 = vpop.f32.mrf.mxu0
        %v911 = vpop.f32.mrf.mxu0
        %v912 = vpop.f32.mrf.mxu0
        %913 = vdwg.mxu0
        %914 = vrot.lane.b32.xlu0 %v629, 120
        %v915 = vpop.permute.xlu0 %914
        %916 = vrot.lane.b32.xlu0 %v629, 88
        %v917 = vpop.permute.xlu0 %916
        %v919 = vsel %vm645, %v915, 0
        %v922 = vsel %vm645, %v917, 0
        %924 = vmatprep.subr.bf16.mxu0 0
        %925 = vmatpush1.bf16.xpose.msra.mxu0 0
        %926 = vmatprep.subr.bf16.mxu0 0
        %927 = vmatpush1.bf16.xpose.msra.mxu0 0
        %928 = vmatprep.subr.bf16.mxu0 0
        %929 = vmatpush1.bf16.xpose.msra.mxu0 0
        %930 = vmatprep.subr.bf16.mxu0 0
        %931 = vmatpush1.bf16.xpose.msra.mxu0 0
        %932 = vmatprep.subr.bf16.mxu0 0
        %933 = vmatpush1.bf16.xpose.msra.mxu0 0
        %934 = vmatprep.subr.bf16.mxu0 0
        %935 = vmatpush1.bf16.xpose.msra.mxu0 0
        %936 = vmatprep.subr.bf16.mxu0 0
        %937 = vmatpush1.bf16.xpose.msra.mxu0 0
        %938 = vmatprep.subr.bf16.mxu0 0
        %939 = vmatpush1.bf16.xpose.msra.mxu0 %v922
        %940 = vmatprep.subr.bf16.mxu0 0
        %941 = vmatpush2.bf16.xpose.msra.mxu0 0
        %942 = vmatprep.subr.bf16.mxu0 0
        %943 = vmatpush2.bf16.xpose.msra.mxu0 0
        %944 = vmatprep.subr.bf16.mxu0 0
        %945 = vmatpush2.bf16.xpose.msra.mxu0 0
        %946 = vmatprep.subr.bf16.mxu0 0
        %947 = vmatpush2.bf16.xpose.msra.mxu0 0
        %948 = vmatprep.subr.bf16.mxu0 0
        %949 = vmatpush2.bf16.xpose.msra.mxu0 0
        %950 = vmatprep.subr.bf16.mxu0 0
        %951 = vmatpush2.bf16.xpose.msra.mxu0 0
        %952 = vmatprep.subr.bf16.mxu0 0
        %953 = vmatpush2.bf16.xpose.msra.mxu0 0
        %954 = vmatprep.subr.bf16.mxu0 0
        %955 = vmatpush2.bf16.xpose.msra.mxu0 0
        %956 = vmatprep.mubr.bf16.mxu0 0
        %957 = vmatmul.mubr.bf16.gmra.mxu0 %v919
        %v958 = vpop.f32.mrf.mxu0
        %v959 = vadd.f32 %v639, %v958
        %v960 = vpop.f32.mrf.mxu0
        %v961 = vpop.f32.mrf.mxu0
        %v962 = vpop.f32.mrf.mxu0
        %963 = vdwg.mxu0
        %v964 = vsel %vm645, %v909, -inf
        %965 = vmax.xlane.f32.xlu0 %v964
        %v966 = vpop.xlane.xlu0 %965
        %v967 = vsel %vm645, %v959, -inf
        %968 = vmax.xlane.f32.xlu0 %v967
        %v969 = vpop.xlane.xlu0 %968
        %v970 = vsub.f32 %v909, %v966
        %v971 = vsub.f32 %v959, %v969
        %v972 = vmul.f32 %v970, 1.442695
        %v973 = vpow.pop %v972
        %v974 = vmul.f32 %v971, 1.442695
        %v975 = vpow.pop %v974
        %v976 = vsel %vm645, %v973, 0.0
        %977 = vadd.xlane.f32.xlu0 %v976
        %v978 = vpop.xlane.xlu0 %977
        %v979 = vsel %vm645, %v975, 0.0
        %980 = vadd.xlane.f32.xlu0 %v979
        %v981 = vpop.xlane.xlu0 %980
        %v982 = vrcp.pop %v978
        %v983 = vrcp.pop %v981
        %v984 = vmul.f32 %v973, %v982
        %v985 = vmul.f32 %v975, %v983
        %v986 = vpack.c.bf16 %v984, %v984
        %v987 = vpack.c.bf16 %v985, %v985
        %988 = vrot.lane.b32.xlu0 %v628, 56
        %v989 = vpop.permute.xlu0 %988
        %v991 = vsel %vm645, %v986, 0
        %v994 = vsel %vm770, %v989, 0
        %996 = vmatprep.subr.bf16.mxu0 0
        %997 = vmatpush1.bf16.msra.mxu0 0
        %998 = vmatprep.subr.bf16.mxu0 0
        %999 = vmatpush1.bf16.msra.mxu0 0
        %1000 = vmatprep.subr.bf16.mxu0 0
        %1001 = vmatpush1.bf16.msra.mxu0 0
        %1002 = vmatprep.subr.bf16.mxu0 0
        %1003 = vmatpush1.bf16.msra.mxu0 0
        %1004 = vmatprep.subr.bf16.mxu0 0
        %1005 = vmatpush1.bf16.msra.mxu0 0
        %1006 = vmatprep.subr.bf16.mxu0 0
        %1007 = vmatpush1.bf16.msra.mxu0 0
        %1008 = vmatprep.subr.bf16.mxu0 0
        %1009 = vmatpush1.bf16.msra.mxu0 0
        %1010 = vmatprep.subr.bf16.mxu0 0
        %1011 = vmatpush1.bf16.msra.mxu0 %v994
        %1012 = vmatprep.subr.bf16.mxu0 0
        %1013 = vmatpush2.bf16.msra.mxu0 0
        %1014 = vmatprep.subr.bf16.mxu0 0
        %1015 = vmatpush2.bf16.msra.mxu0 0
        %1016 = vmatprep.subr.bf16.mxu0 0
        %1017 = vmatpush2.bf16.msra.mxu0 0
        %1018 = vmatprep.subr.bf16.mxu0 0
        %1019 = vmatpush2.bf16.msra.mxu0 0
        %1020 = vmatprep.subr.bf16.mxu0 0
        %1021 = vmatpush2.bf16.msra.mxu0 0
        %1022 = vmatprep.subr.bf16.mxu0 0
        %1023 = vmatpush2.bf16.msra.mxu0 0
        %1024 = vmatprep.subr.bf16.mxu0 0
        %1025 = vmatpush2.bf16.msra.mxu0 0
        %1026 = vmatprep.subr.bf16.mxu0 0
        %1027 = vmatpush2.bf16.msra.mxu0 0
        %1028 = vmatprep.mubr.bf16.mxu0 0
        %1029 = vmatmul.mubr.bf16.gmra.mxu0 %v991
        %v1030 = vpop.f32.mrf.mxu0
        %v1031 = vadd.f32 0.0, %v1030
        %v1032 = vpop.f32.mrf.mxu0
        %v1033 = vpop.f32.mrf.mxu0
        %v1034 = vpop.f32.mrf.mxu0
        %1035 = vdwg.mxu0
        %1036 = vrot.lane.b32.xlu0 %v629, 56
        %v1037 = vpop.permute.xlu0 %1036
        %v1039 = vsel %vm645, %v987, 0
        %v1042 = vsel %vm770, %v1037, 0
        %1044 = vmatprep.subr.bf16.mxu0 0
        %1045 = vmatpush1.bf16.msra.mxu0 0
        %1046 = vmatprep.subr.bf16.mxu0 0
        %1047 = vmatpush1.bf16.msra.mxu0 0
        %1048 = vmatprep.subr.bf16.mxu0 0
        %1049 = vmatpush1.bf16.msra.mxu0 0
        %1050 = vmatprep.subr.bf16.mxu0 0
        %1051 = vmatpush1.bf16.msra.mxu0 0
        %1052 = vmatprep.subr.bf16.mxu0 0
        %1053 = vmatpush1.bf16.msra.mxu0 0
        %1054 = vmatprep.subr.bf16.mxu0 0
        %1055 = vmatpush1.bf16.msra.mxu0 0
        %1056 = vmatprep.subr.bf16.mxu0 0
        %1057 = vmatpush1.bf16.msra.mxu0 0
        %1058 = vmatprep.subr.bf16.mxu0 0
        %1059 = vmatpush1.bf16.msra.mxu0 %v1042
        %1060 = vmatprep.subr.bf16.mxu0 0
        %1061 = vmatpush2.bf16.msra.mxu0 0
        %1062 = vmatprep.subr.bf16.mxu0 0
        %1063 = vmatpush2.bf16.msra.mxu0 0
        %1064 = vmatprep.subr.bf16.mxu0 0
        %1065 = vmatpush2.bf16.msra.mxu0 0
        %1066 = vmatprep.subr.bf16.mxu0 0
        %1067 = vmatpush2.bf16.msra.mxu0 0
        %1068 = vmatprep.subr.bf16.mxu0 0
        %1069 = vmatpush2.bf16.msra.mxu0 0
        %1070 = vmatprep.subr.bf16.mxu0 0
        %1071 = vmatpush2.bf16.msra.mxu0 0
        %1072 = vmatprep.subr.bf16.mxu0 0
        %1073 = vmatpush2.bf16.msra.mxu0 0
        %1074 = vmatprep.subr.bf16.mxu0 0
        %1075 = vmatpush2.bf16.msra.mxu0 0
        %1076 = vmatprep.mubr.bf16.mxu0 0
        %1077 = vmatmul.mubr.bf16.gmra.mxu0 %v1039
        %v1078 = vpop.f32.mrf.mxu0
        %v1079 = vadd.f32 0.0, %v1078
        %v1080 = vpop.f32.mrf.mxu0
        %v1081 = vpop.f32.mrf.mxu0
        %v1082 = vpop.f32.mrf.mxu0
        %1083 = vdwg.mxu0
        %1086 = vrot.lane.b32.xlu0 %v1031, 8
        %v1087 = vpop.permute.xlu0 %1086
        %1088 = vrot.lane.b32.xlu0 %v1079, 8
        %v1089 = vpop.permute.xlu0 %1088
        %vm1092 = vcmask 130112
        %1093 = vst.msk [vmem:[#allocation3] sm:$0xff] %vm1092, %v1087
        %1094 = vst.msk [vmem:[#allocation3 + $0x8] sm:$0xff] %vm1092, %v1089
        %1095 = vrot.lane.b32.xlu0 %v628, 112
        %v1096 = vpop.permute.xlu0 %1095
        %1097 = vrot.lane.b32.xlu0 %v628, 80
        %v1098 = vpop.permute.xlu0 %1097
        %v1100 = vsel %vm645, %v1096, 0
        %v1103 = vsel %vm645, %v1098, 0
        %1105 = vmatprep.subr.bf16.mxu0 0
        %1106 = vmatpush1.bf16.xpose.msra.mxu0 0
        %1107 = vmatprep.subr.bf16.mxu0 0
        %1108 = vmatpush1.bf16.xpose.msra.mxu0 0
        %1109 = vmatprep.subr.bf16.mxu0 0
        %1110 = vmatpush1.bf16.xpose.msra.mxu0 0
        %1111 = vmatprep.subr.bf16.mxu0 0
        %1112 = vmatpush1.bf16.xpose.msra.mxu0 0
        %1113 = vmatprep.subr.bf16.mxu0 0
        %1114 = vmatpush1.bf16.xpose.msra.mxu0 0
        %1115 = vmatprep.subr.bf16.mxu0 0
        %1116 = vmatpush1.bf16.xpose.msra.mxu0 0
        %1117 = vmatprep.subr.bf16.mxu0 0
        %1118 = vmatpush1.bf16.xpose.msra.mxu0 0
        %1119 = vmatprep.subr.bf16.mxu0 0
        %1120 = vmatpush1.bf16.xpose.msra.mxu0 %v1103
        %1121 = vmatprep.subr.bf16.mxu0 0
        %1122 = vmatpush2.bf16.xpose.msra.mxu0 0
        %1123 = vmatprep.subr.bf16.mxu0 0
        %1124 = vmatpush2.bf16.xpose.msra.mxu0 0
        %1125 = vmatprep.subr.bf16.mxu0 0
        %1126 = vmatpush2.bf16.xpose.msra.mxu0 0
        %1127 = vmatprep.subr.bf16.mxu0 0
        %1128 = vmatpush2.bf16.xpose.msra.mxu0 0
        %1129 = vmatprep.subr.bf16.mxu0 0
        %1130 = vmatpush2.bf16.xpose.msra.mxu0 0
        %1131 = vmatprep.subr.bf16.mxu0 0
        %1132 = vmatpush2.bf16.xpose.msra.mxu0 0
        %1133 = vmatprep.subr.bf16.mxu0 0
        %1134 = vmatpush2.bf16.xpose.msra.mxu0 0
        %1135 = vmatprep.subr.bf16.mxu0 0
        %1136 = vmatpush2.bf16.xpose.msra.mxu0 0
        %1137 = vmatprep.mubr.bf16.mxu0 0
        %1138 = vmatmul.mubr.bf16.gmra.mxu0 %v1100
        %v1139 = vpop.f32.mrf.mxu0
        %v1140 = vadd.f32 %v635, %v1139
        %v1141 = vpop.f32.mrf.mxu0
        %v1142 = vpop.f32.mrf.mxu0
        %v1143 = vpop.f32.mrf.mxu0
        %1144 = vdwg.mxu0
        %1145 = vrot.lane.b32.xlu0 %v629, 112
        %v1146 = vpop.permute.xlu0 %1145
        %1147 = vrot.lane.b32.xlu0 %v629, 80
        %v1148 = vpop.permute.xlu0 %1147
        %v1150 = vsel %vm645, %v1146, 0
        %v1153 = vsel %vm645, %v1148, 0
        %1155 = vmatprep.subr.bf16.mxu0 0
        %1156 = vmatpush1.bf16.xpose.msra.mxu0 0
        %1157 = vmatprep.subr.bf16.mxu0 0
        %1158 = vmatpush1.bf16.xpose.msra.mxu0 0
        %1159 = vmatprep.subr.bf16.mxu0 0
        %1160 = vmatpush1.bf16.xpose.msra.mxu0 0
        %1161 = vmatprep.subr.bf16.mxu0 0
        %1162 = vmatpush1.bf16.xpose.msra.mxu0 0
        %1163 = vmatprep.subr.bf16.mxu0 0
        %1164 = vmatpush1.bf16.xpose.msra.mxu0 0
        %1165 = vmatprep.subr.bf16.mxu0 0
        %1166 = vmatpush1.bf16.xpose.msra.mxu0 0
        %1167 = vmatprep.subr.bf16.mxu0 0
        %1168 = vmatpush1.bf16.xpose.msra.mxu0 0
        %1169 = vmatprep.subr.bf16.mxu0 0
        %1170 = vmatpush1.bf16.xpose.msra.mxu0 %v1153
        %1171 = vmatprep.subr.bf16.mxu0 0
        %1172 = vmatpush2.bf16.xpose.msra.mxu0 0
        %1173 = vmatprep.subr.bf16.mxu0 0
        %1174 = vmatpush2.bf16.xpose.msra.mxu0 0
        %1175 = vmatprep.subr.bf16.mxu0 0
        %1176 = vmatpush2.bf16.xpose.msra.mxu0 0
        %1177 = vmatprep.subr.bf16.mxu0 0
        %1178 = vmatpush2.bf16.xpose.msra.mxu0 0
        %1179 = vmatprep.subr.bf16.mxu0 0
        %1180 = vmatpush2.bf16.xpose.msra.mxu0 0
        %1181 = vmatprep.subr.bf16.mxu0 0
        %1182 = vmatpush2.bf16.xpose.msra.mxu0 0
        %1183 = vmatprep.subr.bf16.mxu0 0
        %1184 = vmatpush2.bf16.xpose.msra.mxu0 0
        %1185 = vmatprep.subr.bf16.mxu0 0
        %1186 = vmatpush2.bf16.xpose.msra.mxu0 0
        %1187 = vmatprep.mubr.bf16.mxu0 0
        %1188 = vmatmul.mubr.bf16.gmra.mxu0 %v1150
        %v1189 = vpop.f32.mrf.mxu0
        %v1190 = vadd.f32 %v639, %v1189
        %v1191 = vpop.f32.mrf.mxu0
        %v1192 = vpop.f32.mrf.mxu0
        %v1193 = vpop.f32.mrf.mxu0
        %1194 = vdwg.mxu0
        %v1195 = vsel %vm645, %v1140, -inf
        %1196 = vmax.xlane.f32.xlu0 %v1195
        %v1197 = vpop.xlane.xlu0 %1196
        %v1198 = vsel %vm645, %v1190, -inf
        %1199 = vmax.xlane.f32.xlu0 %v1198
        %v1200 = vpop.xlane.xlu0 %1199
        %v1201 = vsub.f32 %v1140, %v1197
        %v1202 = vsub.f32 %v1190, %v1200
        %v1203 = vmul.f32 %v1201, 1.442695
        %v1204 = vpow.pop %v1203
        %v1205 = vmul.f32 %v1202, 1.442695
        %v1206 = vpow.pop %v1205
        %v1207 = vsel %vm645, %v1204, 0.0
        %1208 = vadd.xlane.f32.xlu0 %v1207
        %v1209 = vpop.xlane.xlu0 %1208
        %v1210 = vsel %vm645, %v1206, 0.0
        %1211 = vadd.xlane.f32.xlu0 %v1210
        %v1212 = vpop.xlane.xlu0 %1211
        %v1213 = vrcp.pop %v1209
        %v1214 = vrcp.pop %v1212
        %v1215 = vmul.f32 %v1204, %v1213
        %v1216 = vmul.f32 %v1206, %v1214
        %v1217 = vpack.c.bf16 %v1215, %v1215
        %v1218 = vpack.c.bf16 %v1216, %v1216
        %1219 = vrot.lane.b32.xlu0 %v628, 48
        %v1220 = vpop.permute.xlu0 %1219
        %v1222 = vsel %vm645, %v1217, 0
        %v1225 = vsel %vm770, %v1220, 0
        %1227 = vmatprep.subr.bf16.mxu0 0
        %1228 = vmatpush1.bf16.msra.mxu0 0
        %1229 = vmatprep.subr.bf16.mxu0 0
        %1230 = vmatpush1.bf16.msra.mxu0 0
        %1231 = vmatprep.subr.bf16.mxu0 0
        %1232 = vmatpush1.bf16.msra.mxu0 0
        %1233 = vmatprep.subr.bf16.mxu0 0
        %1234 = vmatpush1.bf16.msra.mxu0 0
        %1235 = vmatprep.subr.bf16.mxu0 0
        %1236 = vmatpush1.bf16.msra.mxu0 0
        %1237 = vmatprep.subr.bf16.mxu0 0
        %1238 = vmatpush1.bf16.msra.mxu0 0
        %1239 = vmatprep.subr.bf16.mxu0 0
        %1240 = vmatpush1.bf16.msra.mxu0 0
        %1241 = vmatprep.subr.bf16.mxu0 0
        %1242 = vmatpush1.bf16.msra.mxu0 %v1225
        %1243 = vmatprep.subr.bf16.mxu0 0
        %1244 = vmatpush2.bf16.msra.mxu0 0
        %1245 = vmatprep.subr.bf16.mxu0 0
        %1246 = vmatpush2.bf16.msra.mxu0 0
        %1247 = vmatprep.subr.bf16.mxu0 0
        %1248 = vmatpush2.bf16.msra.mxu0 0
        %1249 = vmatprep.subr.bf16.mxu0 0
        %1250 = vmatpush2.bf16.msra.mxu0 0
        %1251 = vmatprep.subr.bf16.mxu0 0
        %1252 = vmatpush2.bf16.msra.mxu0 0
        %1253 = vmatprep.subr.bf16.mxu0 0
        %1254 = vmatpush2.bf16.msra.mxu0 0
        %1255 = vmatprep.subr.bf16.mxu0 0
        %1256 = vmatpush2.bf16.msra.mxu0 0
        %1257 = vmatprep.subr.bf16.mxu0 0
        %1258 = vmatpush2.bf16.msra.mxu0 0
        %1259 = vmatprep.mubr.bf16.mxu0 0
        %1260 = vmatmul.mubr.bf16.gmra.mxu0 %v1222
        %v1261 = vpop.f32.mrf.mxu0
        %v1262 = vadd.f32 0.0, %v1261
        %v1263 = vpop.f32.mrf.mxu0
        %v1264 = vpop.f32.mrf.mxu0
        %v1265 = vpop.f32.mrf.mxu0
        %1266 = vdwg.mxu0
        %1267 = vrot.lane.b32.xlu0 %v629, 48
        %v1268 = vpop.permute.xlu0 %1267
        %v1270 = vsel %vm645, %v1218, 0
        %v1273 = vsel %vm770, %v1268, 0
        %1275 = vmatprep.subr.bf16.mxu0 0
        %1276 = vmatpush1.bf16.msra.mxu0 0
        %1277 = vmatprep.subr.bf16.mxu0 0
        %1278 = vmatpush1.bf16.msra.mxu0 0
        %1279 = vmatprep.subr.bf16.mxu0 0
        %1280 = vmatpush1.bf16.msra.mxu0 0
        %1281 = vmatprep.subr.bf16.mxu0 0
        %1282 = vmatpush1.bf16.msra.mxu0 0
        %1283 = vmatprep.subr.bf16.mxu0 0
        %1284 = vmatpush1.bf16.msra.mxu0 0
        %1285 = vmatprep.subr.bf16.mxu0 0
        %1286 = vmatpush1.bf16.msra.mxu0 0
        %1287 = vmatprep.subr.bf16.mxu0 0
        %1288 = vmatpush1.bf16.msra.mxu0 0
        %1289 = vmatprep.subr.bf16.mxu0 0
        %1290 = vmatpush1.bf16.msra.mxu0 %v1273
        %1291 = vmatprep.subr.bf16.mxu0 0
        %1292 = vmatpush2.bf16.msra.mxu0 0
        %1293 = vmatprep.subr.bf16.mxu0 0
        %1294 = vmatpush2.bf16.msra.mxu0 0
        %1295 = vmatprep.subr.bf16.mxu0 0
        %1296 = vmatpush2.bf16.msra.mxu0 0
        %1297 = vmatprep.subr.bf16.mxu0 0
        %1298 = vmatpush2.bf16.msra.mxu0 0
        %1299 = vmatprep.subr.bf16.mxu0 0
        %1300 = vmatpush2.bf16.msra.mxu0 0
        %1301 = vmatprep.subr.bf16.mxu0 0
        %1302 = vmatpush2.bf16.msra.mxu0 0
        %1303 = vmatprep.subr.bf16.mxu0 0
        %1304 = vmatpush2.bf16.msra.mxu0 0
        %1305 = vmatprep.subr.bf16.mxu0 0
        %1306 = vmatpush2.bf16.msra.mxu0 0
        %1307 = vmatprep.mubr.bf16.mxu0 0
        %1308 = vmatmul.mubr.bf16.gmra.mxu0 %v1270
        %v1309 = vpop.f32.mrf.mxu0
        %v1310 = vadd.f32 0.0, %v1309
        %v1311 = vpop.f32.mrf.mxu0
        %v1312 = vpop.f32.mrf.mxu0
        %v1313 = vpop.f32.mrf.mxu0
        %1314 = vdwg.mxu0
        %1317 = vrot.lane.b32.xlu0 %v1262, 16
        %v1318 = vpop.permute.xlu0 %1317
        %1319 = vrot.lane.b32.xlu0 %v1310, 16
        %v1320 = vpop.permute.xlu0 %1319
        %vm1323 = vcmask 195712
        %1324 = vst.msk [vmem:[#allocation3] sm:$0xff] %vm1323, %v1318
        %1325 = vst.msk [vmem:[#allocation3 + $0x8] sm:$0xff] %vm1323, %v1320
        %1326 = vrot.lane.b32.xlu0 %v628, 104
        %v1327 = vpop.permute.xlu0 %1326
        %1328 = vrot.lane.b32.xlu0 %v628, 72
        %v1329 = vpop.permute.xlu0 %1328
        %v1331 = vsel %vm645, %v1327, 0
        %v1334 = vsel %vm645, %v1329, 0
        %1336 = vmatprep.subr.bf16.mxu0 0
        %1337 = vmatpush1.bf16.xpose.msra.mxu0 0
        %1338 = vmatprep.subr.bf16.mxu0 0
        %1339 = vmatpush1.bf16.xpose.msra.mxu0 0
        %1340 = vmatprep.subr.bf16.mxu0 0
        %1341 = vmatpush1.bf16.xpose.msra.mxu0 0
        %1342 = vmatprep.subr.bf16.mxu0 0
        %1343 = vmatpush1.bf16.xpose.msra.mxu0 0
        %1344 = vmatprep.subr.bf16.mxu0 0
        %1345 = vmatpush1.bf16.xpose.msra.mxu0 0
        %1346 = vmatprep.subr.bf16.mxu0 0
        %1347 = vmatpush1.bf16.xpose.msra.mxu0 0
        %1348 = vmatprep.subr.bf16.mxu0 0
        %1349 = vmatpush1.bf16.xpose.msra.mxu0 0
        %1350 = vmatprep.subr.bf16.mxu0 0
        %1351 = vmatpush1.bf16.xpose.msra.mxu0 %v1334
        %1352 = vmatprep.subr.bf16.mxu0 0
        %1353 = vmatpush2.bf16.xpose.msra.mxu0 0
        %1354 = vmatprep.subr.bf16.mxu0 0
        %1355 = vmatpush2.bf16.xpose.msra.mxu0 0
        %1356 = vmatprep.subr.bf16.mxu0 0
        %1357 = vmatpush2.bf16.xpose.msra.mxu0 0
        %1358 = vmatprep.subr.bf16.mxu0 0
        %1359 = vmatpush2.bf16.xpose.msra.mxu0 0
        %1360 = vmatprep.subr.bf16.mxu0 0
        %1361 = vmatpush2.bf16.xpose.msra.mxu0 0
        %1362 = vmatprep.subr.bf16.mxu0 0
        %1363 = vmatpush2.bf16.xpose.msra.mxu0 0
        %1364 = vmatprep.subr.bf16.mxu0 0
        %1365 = vmatpush2.bf16.xpose.msra.mxu0 0
        %1366 = vmatprep.subr.bf16.mxu0 0
        %1367 = vmatpush2.bf16.xpose.msra.mxu0 0
        %1368 = vmatprep.mubr.bf16.mxu0 0
        %1369 = vmatmul.mubr.bf16.gmra.mxu0 %v1331
        %v1370 = vpop.f32.mrf.mxu0
        %v1371 = vadd.f32 %v635, %v1370
        %v1372 = vpop.f32.mrf.mxu0
        %v1373 = vpop.f32.mrf.mxu0
        %v1374 = vpop.f32.mrf.mxu0
        %1375 = vdwg.mxu0
        %1376 = vrot.lane.b32.xlu0 %v629, 104
        %v1377 = vpop.permute.xlu0 %1376
        %1378 = vrot.lane.b32.xlu0 %v629, 72
        %v1379 = vpop.permute.xlu0 %1378
        %v1381 = vsel %vm645, %v1377, 0
        %v1384 = vsel %vm645, %v1379, 0
        %1386 = vmatprep.subr.bf16.mxu0 0
        %1387 = vmatpush1.bf16.xpose.msra.mxu0 0
        %1388 = vmatprep.subr.bf16.mxu0 0
        %1389 = vmatpush1.bf16.xpose.msra.mxu0 0
        %1390 = vmatprep.subr.bf16.mxu0 0
        %1391 = vmatpush1.bf16.xpose.msra.mxu0 0
        %1392 = vmatprep.subr.bf16.mxu0 0
        %1393 = vmatpush1.bf16.xpose.msra.mxu0 0
        %1394 = vmatprep.subr.bf16.mxu0 0
        %1395 = vmatpush1.bf16.xpose.msra.mxu0 0
        %1396 = vmatprep.subr.bf16.mxu0 0
        %1397 = vmatpush1.bf16.xpose.msra.mxu0 0
        %1398 = vmatprep.subr.bf16.mxu0 0
        %1399 = vmatpush1.bf16.xpose.msra.mxu0 0
        %1400 = vmatprep.subr.bf16.mxu0 0
        %1401 = vmatpush1.bf16.xpose.msra.mxu0 %v1384
        %1402 = vmatprep.subr.bf16.mxu0 0
        %1403 = vmatpush2.bf16.xpose.msra.mxu0 0
        %1404 = vmatprep.subr.bf16.mxu0 0
        %1405 = vmatpush2.bf16.xpose.msra.mxu0 0
        %1406 = vmatprep.subr.bf16.mxu0 0
        %1407 = vmatpush2.bf16.xpose.msra.mxu0 0
        %1408 = vmatprep.subr.bf16.mxu0 0
        %1409 = vmatpush2.bf16.xpose.msra.mxu0 0
        %1410 = vmatprep.subr.bf16.mxu0 0
        %1411 = vmatpush2.bf16.xpose.msra.mxu0 0
        %1412 = vmatprep.subr.bf16.mxu0 0
        %1413 = vmatpush2.bf16.xpose.msra.mxu0 0
        %1414 = vmatprep.subr.bf16.mxu0 0
        %1415 = vmatpush2.bf16.xpose.msra.mxu0 0
        %1416 = vmatprep.subr.bf16.mxu0 0
        %1417 = vmatpush2.bf16.xpose.msra.mxu0 0
        %1418 = vmatprep.mubr.bf16.mxu0 0
        %1419 = vmatmul.mubr.bf16.gmra.mxu0 %v1381
        %v1420 = vpop.f32.mrf.mxu0
        %v1421 = vadd.f32 %v639, %v1420
        %v1422 = vpop.f32.mrf.mxu0
        %v1423 = vpop.f32.mrf.mxu0
        %v1424 = vpop.f32.mrf.mxu0
        %1425 = vdwg.mxu0
        %v1426 = vsel %vm645, %v1371, -inf
        %1427 = vmax.xlane.f32.xlu0 %v1426
        %v1428 = vpop.xlane.xlu0 %1427
        %v1429 = vsel %vm645, %v1421, -inf
        %1430 = vmax.xlane.f32.xlu0 %v1429
        %v1431 = vpop.xlane.xlu0 %1430
        %v1432 = vsub.f32 %v1371, %v1428
        %v1433 = vsub.f32 %v1421, %v1431
        %v1434 = vmul.f32 %v1432, 1.442695
        %v1435 = vpow.pop %v1434
        %v1436 = vmul.f32 %v1433, 1.442695
        %v1437 = vpow.pop %v1436
        %v1438 = vsel %vm645, %v1435, 0.0
        %1439 = vadd.xlane.f32.xlu0 %v1438
        %v1440 = vpop.xlane.xlu0 %1439
        %v1441 = vsel %vm645, %v1437, 0.0
        %1442 = vadd.xlane.f32.xlu0 %v1441
        %v1443 = vpop.xlane.xlu0 %1442
        %v1444 = vrcp.pop %v1440
        %v1445 = vrcp.pop %v1443
        %v1446 = vmul.f32 %v1435, %v1444
        %v1447 = vmul.f32 %v1437, %v1445
        %v1448 = vpack.c.bf16 %v1446, %v1446
        %v1449 = vpack.c.bf16 %v1447, %v1447
        %1450 = vrot.lane.b32.xlu0 %v628, 40
        %v1451 = vpop.permute.xlu0 %1450
        %v1453 = vsel %vm645, %v1448, 0
        %v1456 = vsel %vm770, %v1451, 0
        %1458 = vmatprep.subr.bf16.mxu0 0
        %1459 = vmatpush1.bf16.msra.mxu0 0
        %1460 = vmatprep.subr.bf16.mxu0 0
        %1461 = vmatpush1.bf16.msra.mxu0 0
        %1462 = vmatprep.subr.bf16.mxu0 0
        %1463 = vmatpush1.bf16.msra.mxu0 0
        %1464 = vmatprep.subr.bf16.mxu0 0
        %1465 = vmatpush1.bf16.msra.mxu0 0
        %1466 = vmatprep.subr.bf16.mxu0 0
        %1467 = vmatpush1.bf16.msra.mxu0 0
        %1468 = vmatprep.subr.bf16.mxu0 0
        %1469 = vmatpush1.bf16.msra.mxu0 0
        %1470 = vmatprep.subr.bf16.mxu0 0
        %1471 = vmatpush1.bf16.msra.mxu0 0
        %1472 = vmatprep.subr.bf16.mxu0 0
        %1473 = vmatpush1.bf16.msra.mxu0 %v1456
        %1474 = vmatprep.subr.bf16.mxu0 0
        %1475 = vmatpush2.bf16.msra.mxu0 0
        %1476 = vmatprep.subr.bf16.mxu0 0
        %1477 = vmatpush2.bf16.msra.mxu0 0
        %1478 = vmatprep.subr.bf16.mxu0 0
        %1479 = vmatpush2.bf16.msra.mxu0 0
        %1480 = vmatprep.subr.bf16.mxu0 0
        %1481 = vmatpush2.bf16.msra.mxu0 0
        %1482 = vmatprep.subr.bf16.mxu0 0
        %1483 = vmatpush2.bf16.msra.mxu0 0
        %1484 = vmatprep.subr.bf16.mxu0 0
        %1485 = vmatpush2.bf16.msra.mxu0 0
        %1486 = vmatprep.subr.bf16.mxu0 0
        %1487 = vmatpush2.bf16.msra.mxu0 0
        %1488 = vmatprep.subr.bf16.mxu0 0
        %1489 = vmatpush2.bf16.msra.mxu0 0
        %1490 = vmatprep.mubr.bf16.mxu0 0
        %1491 = vmatmul.mubr.bf16.gmra.mxu0 %v1453
        %v1492 = vpop.f32.mrf.mxu0
        %v1493 = vadd.f32 0.0, %v1492
        %v1494 = vpop.f32.mrf.mxu0
        %v1495 = vpop.f32.mrf.mxu0
        %v1496 = vpop.f32.mrf.mxu0
        %1497 = vdwg.mxu0
        %1498 = vrot.lane.b32.xlu0 %v629, 40
        %v1499 = vpop.permute.xlu0 %1498
        %v1501 = vsel %vm645, %v1449, 0
        %v1504 = vsel %vm770, %v1499, 0
        %1506 = vmatprep.subr.bf16.mxu0 0
        %1507 = vmatpush1.bf16.msra.mxu0 0
        %1508 = vmatprep.subr.bf16.mxu0 0
        %1509 = vmatpush1.bf16.msra.mxu0 0
        %1510 = vmatprep.subr.bf16.mxu0 0
        %1511 = vmatpush1.bf16.msra.mxu0 0
        %1512 = vmatprep.subr.bf16.mxu0 0
        %1513 = vmatpush1.bf16.msra.mxu0 0
        %1514 = vmatprep.subr.bf16.mxu0 0
        %1515 = vmatpush1.bf16.msra.mxu0 0
        %1516 = vmatprep.subr.bf16.mxu0 0
        %1517 = vmatpush1.bf16.msra.mxu0 0
        %1518 = vmatprep.subr.bf16.mxu0 0
        %1519 = vmatpush1.bf16.msra.mxu0 0
        %1520 = vmatprep.subr.bf16.mxu0 0
        %1521 = vmatpush1.bf16.msra.mxu0 %v1504
        %1522 = vmatprep.subr.bf16.mxu0 0
        %1523 = vmatpush2.bf16.msra.mxu0 0
        %1524 = vmatprep.subr.bf16.mxu0 0
        %1525 = vmatpush2.bf16.msra.mxu0 0
        %1526 = vmatprep.subr.bf16.mxu0 0
        %1527 = vmatpush2.bf16.msra.mxu0 0
        %1528 = vmatprep.subr.bf16.mxu0 0
        %1529 = vmatpush2.bf16.msra.mxu0 0
        %1530 = vmatprep.subr.bf16.mxu0 0
        %1531 = vmatpush2.bf16.msra.mxu0 0
        %1532 = vmatprep.subr.bf16.mxu0 0
        %1533 = vmatpush2.bf16.msra.mxu0 0
        %1534 = vmatprep.subr.bf16.mxu0 0
        %1535 = vmatpush2.bf16.msra.mxu0 0
        %1536 = vmatprep.subr.bf16.mxu0 0
        %1537 = vmatpush2.bf16.msra.mxu0 0
        %1538 = vmatprep.mubr.bf16.mxu0 0
        %1539 = vmatmul.mubr.bf16.gmra.mxu0 %v1501
        %v1540 = vpop.f32.mrf.mxu0
        %v1541 = vadd.f32 0.0, %v1540
        %v1542 = vpop.f32.mrf.mxu0
        %v1543 = vpop.f32.mrf.mxu0
        %v1544 = vpop.f32.mrf.mxu0
        %1545 = vdwg.mxu0
        %1548 = vrot.lane.b32.xlu0 %v1493, 24
        %v1549 = vpop.permute.xlu0 %1548
        %1550 = vrot.lane.b32.xlu0 %v1541, 24
        %v1551 = vpop.permute.xlu0 %1550
        %vm1554 = vcmask 261312
        %1555 = vst.msk [vmem:[#allocation3] sm:$0xff] %vm1554, %v1549
        %1556 = vst.msk [vmem:[#allocation3 + $0x8] sm:$0xff] %vm1554, %v1551
        %v1557 = vld [vmem:[#allocation3] sm:$0xff]
        %v1558 = vld [vmem:[#allocation3 + $0x8] sm:$0xff]
        %v1559 = vld [vmem:[%s493] sm:$0xf]
        %v1560 = vld [vmem:[%s493 + $0x4] sm:$0xf]
        %v1561 = vld [vmem:[%s493 + $0x8] sm:$0xf]
        %v1562 = vld [vmem:[%s493 + $0xc] sm:$0xf]
        %v1563 = vpack.c.bf16 %v1558, %v1557
        %v1564 = vlaneseq
        %v1565 = vshrl.u32 %v1564, 7
        %v1566 = vsub.s32 5, %v1565
        %v1567 = vrot.slane %v518, %v1566
        %v1572 = vunpack.c.l.b16 %v1559
        %v1573 = vunpack.c.l.b16 %v1560
        %v1574 = vunpack.c.l.b16 %v1561
        %v1575 = vunpack.c.l.b16 %v1562
        %v1576 = vpack.c.b16 %v1573, %v1572
        %v1577 = vpack.c.b16 %v1575, %v1574
        %v1581 = vsel %vm521, %v1563, 0
        %1583 = vmatprep.subr.bf16.mxu0 0
        %1584 = vmatpush1.bf16.msra.mxu0 0
        %1585 = vmatprep.subr.bf16.mxu0 0
        %1586 = vmatpush1.bf16.msra.mxu0 0
        %1587 = vmatprep.subr.bf16.mxu0 0
        %1588 = vmatpush1.bf16.msra.mxu0 0
        %1589 = vmatprep.subr.bf16.mxu0 0
        %1590 = vmatpush1.bf16.msra.mxu0 0
        %1591 = vmatprep.subr.bf16.mxu0 0
        %1592 = vmatpush1.bf16.msra.mxu0 0
        %1593 = vmatprep.subr.bf16.mxu0 0
        %1594 = vmatpush1.bf16.msra.mxu0 0
        %1595 = vmatprep.subr.bf16.mxu0 0
        %1596 = vmatpush1.bf16.msra.mxu0 %v1577
        %1597 = vmatprep.subr.bf16.mxu0 0
        %1598 = vmatpush1.bf16.msra.mxu0 %v1576
        %1599 = vmatprep.subr.bf16.mxu0 0
        %1600 = vmatpush2.bf16.msra.mxu0 0
        %1601 = vmatprep.subr.bf16.mxu0 0
        %1602 = vmatpush2.bf16.msra.mxu0 0
        %1603 = vmatprep.subr.bf16.mxu0 0
        %1604 = vmatpush2.bf16.msra.mxu0 0
        %1605 = vmatprep.subr.bf16.mxu0 0
        %1606 = vmatpush2.bf16.msra.mxu0 0
        %1607 = vmatprep.subr.bf16.mxu0 0
        %1608 = vmatpush2.bf16.msra.mxu0 0
        %1609 = vmatprep.subr.bf16.mxu0 0
        %1610 = vmatpush2.bf16.msra.mxu0 0
        %1611 = vmatprep.subr.bf16.mxu0 0
        %1612 = vmatpush2.bf16.msra.mxu0 0
        %1613 = vmatprep.subr.bf16.mxu0 0
        %1614 = vmatpush2.bf16.msra.mxu0 0
        %1615 = vmatprep.mubr.bf16.mxu0 0
        %1616 = vmatmul.mubr.bf16.gmra.mxu0 %v1581
        %v1617 = vpop.f32.mrf.mxu0
        %v1618 = vadd.f32 %v1567, %v1617
        %v1619 = vpop.f32.mrf.mxu0
        %v1620 = vpop.f32.mrf.mxu0
        %v1621 = vadd.f32 %v1567, %v1620
        %v1622 = vpop.f32.mrf.mxu0
        %1623 = vdwg.mxu0
        %v1624 = vadd.f32 %v519, %v1618
        %v1625 = vadd.f32 %v520, %v1621
        %v1626 = vsel %vm521, %v1624, 0.0
        %1627 = vadd.xlane.f32.xlu0 %v1626
        %v1628 = vpop.xlane.xlu0 %1627
        %v1629 = vsel %vm521, %v1625, 0.0
        %1630 = vadd.xlane.f32.xlu0 %v1629
        %v1631 = vpop.xlane.xlu0 %1630
        %v1632 = vmul.f32 %v1628, %v528
        %v1633 = vmul.f32 %v1631, %v528
        %v1634 = vsub.f32 %v1624, %v1632
        %v1635 = vsub.f32 %v1625, %v1633
        %v1636 = vmul.f32 %v1634, %v1634
        %v1637 = vmul.f32 %v1635, %v1635
        %v1638 = vsel %vm521, %v1636, 0.0
        %1639 = vadd.xlane.f32.xlu0 %v1638
        %v1640 = vpop.xlane.xlu0 %1639
        %v1641 = vsel %vm521, %v1637, 0.0
        %1642 = vadd.xlane.f32.xlu0 %v1641
        %v1643 = vpop.xlane.xlu0 %1642
        %v1644 = vmul.f32 %v1640, %v528
        %v1645 = vmul.f32 %v1643, %v528
        %v1646 = vadd.f32 %v1644, 1e-05
        %v1647 = vadd.f32 %v1645, 1e-05
        %v1648 = vrsqrt.pop %v1646
        %v1649 = vrsqrt.pop %v1647
        %v1650 = vmul.f32 %v1634, %v1648
        %v1651 = vmul.f32 %v1635, %v1649
        %v1652 = vlaneseq
        %v1653 = vshrl.u32 %v1652, 7
        %v1654 = vsub.s32 2, %v1653
        %v1655 = vrot.slane %v518, %v1654
        %v1656 = vmul.f32 %v1650, %v1655
        %v1657 = vmul.f32 %v1651, %v1655
        %v1658 = vlaneseq
        %v1659 = vshrl.u32 %v1658, 7
        %v1660 = vsub.s32 3, %v1659
        %v1661 = vrot.slane %v518, %v1660
        %v1662 = vadd.f32 %v1656, %v1661
        %v1663 = vadd.f32 %v1657, %v1661
        %v1664 = vld [vmem:[%s498] sm:$0xf]
        %v1665 = vld [vmem:[%s498 + $0x4] sm:$0xf]
        %v1666 = vld [vmem:[%s498 + $0x8] sm:$0xf]
        %v1667 = vld [vmem:[%s498 + $0xc] sm:$0xf]
        %v1668 = vpack.c.bf16 %v1663, %v1662
        %v1669 = vlaneseq
        %v1670 = vshrl.u32 %v1669, 7
        %v1671 = vsub.s32 7, %v1670
        %v1672 = vrot.slane %v518, %v1671
        %v1677 = vunpack.c.l.b16 %v1664
        %v1678 = vunpack.c.l.b16 %v1665
        %v1679 = vunpack.c.l.b16 %v1666
        %v1680 = vunpack.c.l.b16 %v1667
        %v1681 = vpack.c.b16 %v1678, %v1677
        %v1682 = vpack.c.b16 %v1680, %v1679
        %v1686 = vsel %vm521, %v1668, 0
        %1688 = vmatprep.subr.bf16.mxu0 0
        %1689 = vmatpush1.bf16.msra.mxu0 0
        %1690 = vmatprep.subr.bf16.mxu0 0
        %1691 = vmatpush1.bf16.msra.mxu0 0
        %1692 = vmatprep.subr.bf16.mxu0 0
        %1693 = vmatpush1.bf16.msra.mxu0 0
        %1694 = vmatprep.subr.bf16.mxu0 0
        %1695 = vmatpush1.bf16.msra.mxu0 0
        %1696 = vmatprep.subr.bf16.mxu0 0
        %1697 = vmatpush1.bf16.msra.mxu0 0
        %1698 = vmatprep.subr.bf16.mxu0 0
        %1699 = vmatpush1.bf16.msra.mxu0 0
        %1700 = vmatprep.subr.bf16.mxu0 0
        %1701 = vmatpush1.bf16.msra.mxu0 %v1682
        %1702 = vmatprep.subr.bf16.mxu0 0
        %1703 = vmatpush1.bf16.msra.mxu0 %v1681
        %1704 = vmatprep.subr.bf16.mxu0 0
        %1705 = vmatpush2.bf16.msra.mxu0 0
        %1706 = vmatprep.subr.bf16.mxu0 0
        %1707 = vmatpush2.bf16.msra.mxu0 0
        %1708 = vmatprep.subr.bf16.mxu0 0
        %1709 = vmatpush2.bf16.msra.mxu0 0
        %1710 = vmatprep.subr.bf16.mxu0 0
        %1711 = vmatpush2.bf16.msra.mxu0 0
        %1712 = vmatprep.subr.bf16.mxu0 0
        %1713 = vmatpush2.bf16.msra.mxu0 0
        %1714 = vmatprep.subr.bf16.mxu0 0
        %1715 = vmatpush2.bf16.msra.mxu0 0
        %1716 = vmatprep.subr.bf16.mxu0 0
        %1717 = vmatpush2.bf16.msra.mxu0 0
        %1718 = vmatprep.subr.bf16.mxu0 0
        %1719 = vmatpush2.bf16.msra.mxu0 0
        %1720 = vmatprep.mubr.bf16.mxu0 0
        %1721 = vmatmul.mubr.bf16.gmra.mxu0 %v1686
        %v1722 = vpop.f32.mrf.mxu0
        %v1723 = vadd.f32 %v1672, %v1722
        %v1724 = vpop.f32.mrf.mxu0
        %v1725 = vpop.f32.mrf.mxu0
        %v1726 = vadd.f32 %v1672, %v1725
        %v1727 = vpop.f32.mrf.mxu0
        %1728 = vdwg.mxu0
        %v1729 = vmax.f32 %v1723, 0.0
        %v1730 = vmax.f32 %v1726, 0.0
        %v1731 = vld [vmem:[%s503] sm:$0xf]
        %v1732 = vld [vmem:[%s503 + $0x4] sm:$0xf]
        %v1733 = vld [vmem:[%s503 + $0x8] sm:$0xf]
        %v1734 = vld [vmem:[%s503 + $0xc] sm:$0xf]
        %v1735 = vld [vmem:[%s503 + $0x10] sm:$0xf]
        %v1736 = vld [vmem:[%s503 + $0x14] sm:$0xf]
        %v1737 = vld [vmem:[%s503 + $0x18] sm:$0xf]
        %v1738 = vld [vmem:[%s503 + $0x1c] sm:$0xf]
        %v1739 = vld [vmem:[%s503 + $0x20] sm:$0xf]
        %v1740 = vld [vmem:[%s503 + $0x24] sm:$0xf]
        %v1741 = vld [vmem:[%s503 + $0x28] sm:$0xf]
        %v1742 = vld [vmem:[%s503 + $0x2c] sm:$0xf]
        %v1743 = vld [vmem:[%s503 + $0x30] sm:$0xf]
        %v1744 = vld [vmem:[%s503 + $0x34] sm:$0xf]
        %v1745 = vld [vmem:[%s503 + $0x38] sm:$0xf]
        %v1746 = vld [vmem:[%s503 + $0x3c] sm:$0xf]
        %v1747 = vpack.c.bf16 %v1730, %v1729
        %v1748 = vlaneseq
        %v1749 = vshrl.u32 %v1748, 7
        %v1750 = vsub.s32 6, %v1749
        %v1751 = vrot.slane %v518, %v1750
        %v1768 = vunpack.c.l.b16 %v1731
        %v1769 = vunpack.c.l.b16 %v1732
        %v1770 = vunpack.c.l.b16 %v1733
        %v1771 = vunpack.c.l.b16 %v1734
        %v1772 = vunpack.c.l.b16 %v1735
        %v1773 = vunpack.c.l.b16 %v1736
        %v1774 = vunpack.c.l.b16 %v1737
        %v1775 = vunpack.c.l.b16 %v1738
        %v1776 = vunpack.c.l.b16 %v1739
        %v1777 = vunpack.c.l.b16 %v1740
        %v1778 = vunpack.c.l.b16 %v1741
        %v1779 = vunpack.c.l.b16 %v1742
        %v1780 = vunpack.c.l.b16 %v1743
        %v1781 = vunpack.c.l.b16 %v1744
        %v1782 = vunpack.c.l.b16 %v1745
        %v1783 = vunpack.c.l.b16 %v1746
        %v1784 = vpack.c.b16 %v1769, %v1768
        %v1785 = vpack.c.b16 %v1771, %v1770
        %v1786 = vpack.c.b16 %v1773, %v1772
        %v1787 = vpack.c.b16 %v1775, %v1774
        %v1788 = vpack.c.b16 %v1777, %v1776
        %v1789 = vpack.c.b16 %v1779, %v1778
        %v1790 = vpack.c.b16 %v1781, %v1780
        %v1791 = vpack.c.b16 %v1783, %v1782
        %1800 = vmatprep.subr.bf16.mxu0 0
        %1801 = vmatpush1.bf16.msra.mxu0 %v1791
        %1802 = vmatprep.subr.bf16.mxu0 0
        %1803 = vmatpush1.bf16.msra.mxu0 %v1790
        %1804 = vmatprep.subr.bf16.mxu0 0
        %1805 = vmatpush1.bf16.msra.mxu0 %v1789
        %1806 = vmatprep.subr.bf16.mxu0 0
        %1807 = vmatpush1.bf16.msra.mxu0 %v1788
        %1808 = vmatprep.subr.bf16.mxu0 0
        %1809 = vmatpush1.bf16.msra.mxu0 %v1787
        %1810 = vmatprep.subr.bf16.mxu0 0
        %1811 = vmatpush1.bf16.msra.mxu0 %v1786
        %1812 = vmatprep.subr.bf16.mxu0 0
        %1813 = vmatpush1.bf16.msra.mxu0 %v1785
        %1814 = vmatprep.subr.bf16.mxu0 0
        %1815 = vmatpush1.bf16.msra.mxu0 %v1784
        %1816 = vmatprep.subr.bf16.mxu0 0
        %1817 = vmatpush2.bf16.msra.mxu0 0
        %1818 = vmatprep.subr.bf16.mxu0 0
        %1819 = vmatpush2.bf16.msra.mxu0 0
        %1820 = vmatprep.subr.bf16.mxu0 0
        %1821 = vmatpush2.bf16.msra.mxu0 0
        %1822 = vmatprep.subr.bf16.mxu0 0
        %1823 = vmatpush2.bf16.msra.mxu0 0
        %1824 = vmatprep.subr.bf16.mxu0 0
        %1825 = vmatpush2.bf16.msra.mxu0 0
        %1826 = vmatprep.subr.bf16.mxu0 0
        %1827 = vmatpush2.bf16.msra.mxu0 0
        %1828 = vmatprep.subr.bf16.mxu0 0
        %1829 = vmatpush2.bf16.msra.mxu0 0
        %1830 = vmatprep.subr.bf16.mxu0 0
        %1831 = vmatpush2.bf16.msra.mxu0 0
        %1832 = vmatprep.mubr.bf16.mxu0 0
        %1833 = vmatmul.mubr.bf16.gmra.mxu0 %v1747
        %v1834 = vpop.f32.mrf.mxu0
        %v1835 = vadd.f32 %v1751, %v1834
        %v1836 = vpop.f32.mrf.mxu0
        %v1837 = vpop.f32.mrf.mxu0
        %v1838 = vadd.f32 %v1751, %v1837
        %v1839 = vpop.f32.mrf.mxu0
        %1840 = vdwg.mxu0
        %v1841 = vadd.f32 %v1624, %v1835
        %v1842 = vadd.f32 %v1625, %v1838
        %1843 = vst.msk [vmem:[#allocation2] sm:$0xff] %vm521, %v1841
        %1844 = vst.msk [vmem:[#allocation2 + $0x8] sm:$0xff] %vm521, %v1842
        %p1845 = scmp.eq.s32.totalorder %s28, 1
        // Predicated region
        $region69: #{tpu_custom_call.1} parent=63 // pred_check
          %p1846 = pneg %p1845
        $region70: #{tpu_custom_call.1} parent=63 // pred_check_branch
          %1848 = sbr.rel (%p1846) target = $region72
        $region71: #{tpu_custom_call.1} parent=63 // pred_region
          %v1849 = vsel %vm521, %v1841, -inf
          %v1850 = vrot.slane %v1849, 4
          %v1851 = vmax.f32 %v1849, %v1850
          %v1852 = vrot.slane %v1851, 2
          %v1853 = vmax.f32 %v1851, %v1852
          %v1854 = vrot.slane %v1853, 1
          %v1855 = vmax.f32 %v1853, %v1854
          %v1856 = vsel %vm521, %v1842, -inf
          %v1857 = vrot.slane %v1856, 4
          %v1858 = vmax.f32 %v1856, %v1857
          %v1859 = vrot.slane %v1858, 2
          %v1860 = vmax.f32 %v1858, %v1859
          %v1861 = vrot.slane %v1860, 1
          %v1862 = vmax.f32 %v1860, %v1861
          %v1863 = vld [vmem:[%s7] sm:$0x1]
          %v1864 = vld [vmem:[%s8] sm:$0x1]
          %vm1867 = vcmask 1041409
          %v1868 = vsel %vm1867, %v1862, %v1855
          %vm1870 = vcmask 254976
          %v1871 = vsel %vm1870, %v1868, 0.0
          %1872 = vadd.xlane.f32.xlu0 %v1871
          %v1873 = vpop.xlane.xlu0 %1872
          %v1874 = vmul.f32 %v1873, %v528
          %v1876 = vrot.slane %v1874, 1
          %v1879 = vsub.f32 %v1855, %v1874
          %v1880 = vsub.f32 %v1862, %v1876
          %v1881 = vmul.f32 %v1879, %v1879
          %v1882 = vmul.f32 %v1880, %v1880
          %v1885 = vrot.slane %v1882, 7
          %v1886 = vsel %vm1867, %v1885, %v1881
          %v1888 = vsel %vm1870, %v1886, 0.0
          %1889 = vadd.xlane.f32.xlu0 %v1888
          %v1890 = vpop.xlane.xlu0 %1889
          %v1891 = vmul.f32 %v1890, %v528
          %v1892 = vadd.f32 %v1891, 1e-05
          %v1893 = vrsqrt.pop %v1892
          %v1895 = vrot.slane %v1893, 1
          %v1898 = vmul.f32 %v1879, %v1893
          %v1899 = vmul.f32 %v1880, %v1895
          %v1901 = vlaneseq
          %v1902 = vshrl.u32 %v1901, 7
          %v1903 = vsub.s32 0, %v1902
          %v1904 = vrot.slane %v1863, %v1903
          %v1906 = vmul.f32 %v1898, %v1904
          %v1907 = vmul.f32 %v1899, %v1904
          %v1909 = vlaneseq
          %v1910 = vshrl.u32 %v1909, 7
          %v1911 = vsub.s32 0, %v1910
          %v1912 = vrot.slane %v1864, %v1911
          %v1914 = vadd.f32 %v1906, %v1912
          %v1915 = vadd.f32 %v1907, %v1912
          %v1916 = vld [vmem:[%s9] sm:$0xf]
          %v1917 = vld [vmem:[%s9 + $0x4] sm:$0xf]
          %v1918 = vld [vmem:[%s9 + $0x8] sm:$0xf]
          %v1919 = vld [vmem:[%s9 + $0xc] sm:$0xf]
          %v1920 = vpack.c.bf16 %v1914, %v1914
          %v1921 = vpack.c.bf16 %v1915, %v1915
          %v1922 = vld [vmem:[%s10] sm:$0x1]
          %v1924 = vlaneseq
          %v1925 = vshrl.u32 %v1924, 7
          %v1926 = vsub.s32 0, %v1925
          %v1927 = vrot.slane %v1922, %v1926
          %v1931 = vunpack.c.l.b16 %v1920
          %v1932 = vunpack.c.l.b16 %v1921
          %v1933 = vrot.slane %v1932, 7
          %v1934 = vsel %vm1867, %v1933, %v1931
          %v1935 = vpack.c.b16 %v1934, %v1934
          %v1940 = vunpack.c.l.b16 %v1916
          %v1941 = vunpack.c.l.b16 %v1917
          %v1942 = vunpack.c.l.b16 %v1918
          %v1943 = vunpack.c.l.b16 %v1919
          %v1944 = vpack.c.b16 %v1941, %v1940
          %v1945 = vpack.c.b16 %v1943, %v1942
          %v1949 = vsel %vm521, %v1935, 0
          %1951 = vmatprep.subr.bf16.mxu0 0
          %1952 = vmatpush1.bf16.msra.mxu0 0
          %1953 = vmatprep.subr.bf16.mxu0 0
          %1954 = vmatpush1.bf16.msra.mxu0 0
          %1955 = vmatprep.subr.bf16.mxu0 0
          %1956 = vmatpush1.bf16.msra.mxu0 0
          %1957 = vmatprep.subr.bf16.mxu0 0
          %1958 = vmatpush1.bf16.msra.mxu0 0
          %1959 = vmatprep.subr.bf16.mxu0 0
          %1960 = vmatpush1.bf16.msra.mxu0 0
          %1961 = vmatprep.subr.bf16.mxu0 0
          %1962 = vmatpush1.bf16.msra.mxu0 0
          %1963 = vmatprep.subr.bf16.mxu0 0
          %1964 = vmatpush1.bf16.msra.mxu0 %v1945
          %1965 = vmatprep.subr.bf16.mxu0 0
          %1966 = vmatpush1.bf16.msra.mxu0 %v1944
          %1967 = vmatprep.subr.bf16.mxu0 0
          %1968 = vmatpush2.bf16.msra.mxu0 0
          %1969 = vmatprep.subr.bf16.mxu0 0
          %1970 = vmatpush2.bf16.msra.mxu0 0
          %1971 = vmatprep.subr.bf16.mxu0 0
          %1972 = vmatpush2.bf16.msra.mxu0 0
          %1973 = vmatprep.subr.bf16.mxu0 0
          %1974 = vmatpush2.bf16.msra.mxu0 0
          %1975 = vmatprep.subr.bf16.mxu0 0
          %1976 = vmatpush2.bf16.msra.mxu0 0
          %1977 = vmatprep.subr.bf16.mxu0 0
          %1978 = vmatpush2.bf16.msra.mxu0 0
          %1979 = vmatprep.subr.bf16.mxu0 0
          %1980 = vmatpush2.bf16.msra.mxu0 0
          %1981 = vmatprep.subr.bf16.mxu0 0
          %1982 = vmatpush2.bf16.msra.mxu0 0
          %1983 = vmatprep.mubr.bf16.mxu0 0
          %1984 = vmatmul.mubr.bf16.gmra.mxu0 %v1949
          %v1985 = vpop.f32.mrf.mxu0
          %v1986 = vadd.f32 %v1927, %v1985
          %v1987 = vpop.f32.mrf.mxu0
          %v1988 = vpop.f32.mrf.mxu0
          %v1989 = vpop.f32.mrf.mxu0
          %1990 = vdwg.mxu0
          %vm1991 = vcmask 25600
          %1992 = vst.msk [vmem:[#allocation4] sm:$0x3] %vm1991, %v1986
        $region72: #{tpu_custom_call.1} parent=63 // pred_fallthru
          _
        // Predicated region
        $region73: #{tpu_custom_call.1} parent=63 // pred_check
          %p1993 = pneg %p319
        $region74: #{tpu_custom_call.1} parent=63 // pred_check_branch
          %1995 = sbr.rel (%p1993) target = $region76
        $region75: #{tpu_custom_call.1} parent=63 // pred_region
          %s1997 = ssub.s32 32, 32
          %1998 = vsyncadd [#allocation5], %s1997
          %s1999 = smul.addr %s27, 32
          %s2000 = scalar_lea.hbm %s11, %s1999
          %s2002 = sshll.u32 [#allocation4], 4
          %s2003 = int_to_ptr.vmem [resolvable:$true] %s2002
          %2005 = dma.vmem_to_hbm [thread:$0]  %s2003, 32, %s2000, [#allocation5]
        $region76: #{tpu_custom_call.1} parent=63 // pred_fallthru
          _
        // Predicated region
        $region77: #{tpu_custom_call.1} parent=63 // pred_check
          %p2006 = pneg %p319
        $region78: #{tpu_custom_call.1} parent=63 // pred_check_branch
          %2008 = sbr.rel (%p2006) target = $region80
        $region79: #{tpu_custom_call.1} parent=63 // pred_region
          %2009 = dma.done [#allocation5], 32
        $region80: #{tpu_custom_call.1} parent=63 // pred_fallthru
          _
      $region64: #{tpu_custom_call.1} parent=5 // pred_fallthru
        _
      %p2010 = scmp.le.s32.totalorder 2, %s18
      // Predicated region
      $region81: #{tpu_custom_call.1} parent=5 // pred_check
        %p2011 = pneg %p2010
      $region82: #{tpu_custom_call.1} parent=5 // pred_check_branch
        %2013 = sbr.rel (%p2011) target = $region84
      $region83: #{tpu_custom_call.1} parent=5 // pred_region
        %s2014 = ssub.s32 %s18, 2
      $region84: #{tpu_custom_call.1} parent=5 // pred_fallthru
        _
    $region6: #{tpu_custom_call.1} parent=1 // loop_footer
      %s22 = sadd.s32 1, %s18
    $region7: #{tpu_custom_call.1} parent=1 // loop_footer_branch
      %17 = sbr.rel target = $region3
    $region8: #{tpu_custom_call.1} parent=1 // loop_exit
      _
    %2015 = vsyncpa [#allocation5], 1
    %s2016 = scalar_lea.sflag [#allocation5], 1
    %2017 = vsyncpa %s2016, 1

</llo_original>
